<compile_context>
chip_gen: v5e
topology: v5e:2x2
jax: 0.10.0
libtpu: 0.0.40
codegen_flags: <defaults>
</compile_context>

<pallas_src>
import functools
import math

import jax
import jax.numpy as jnp
from jax.experimental import pallas as pl
from jax.experimental.pallas import tpu as pltpu


# ---------------------------------------------------------------------------
# Pallas kernel: one grid step == Bb folded batch elements.
# Row layout of the in-kernel slab: [Bb*Sr rgb rows (batch-major) |
#                                    Bb*Sd depth rows (batch-major)].
# ---------------------------------------------------------------------------
def _transfuser_kernel(
    rgb_ref,      # (Bb*Sr, Cv)   matmul dtype
    dep_ref,      # (Bb*Sd, Cd)   matmul dtype
    w_pv_ref,     # (Cv, T)       matmul dtype
    b_pv_ref,     # (1, T)        f32
    w_pd_ref,     # (Cd, T)       matmul dtype
    b_pd_ref,     # (1, T)        f32
    w_qkv_ref,    # (T, 3T)       matmul dtype (LN affines + q-scale folded in)
    b_qkv_ref,    # (1, 3T)       f32
    lnv_w_ref,    # (1, T)        f32
    lnv_b_ref,    # (1, T)        f32
    wo_ref,       # (T, T)        matmul dtype
    bo_ref,       # (1, T)        f32
    gamma_ref,    # (1, T)        f32
    mask_ref,     # (R, R)        f32   0 / -1e30 batch block-diagonal mask
    out_rgb_ref,  # (Bb*Sr, T)    f32
    out_dep_ref,  # (Bb*Sd, T)    f32
    *, num_heads: int, head_dim: int, block_batch: int, matmul_dtype,
):
    f32 = jnp.float32
    md = matmul_dtype
    H, hd = num_heads, head_dim
    Rr = rgb_ref.shape[0]
    T = w_qkv_ref.shape[0]

    # ---- input projections on the flattened (Bb*S, .) slabs ----------------
    # (biases stay f32 and are added outside the MXU)
    xr = jnp.dot(rgb_ref[...], w_pv_ref[...],
                 preferred_element_type=f32) + b_pv_ref[...]
    xd = jnp.dot(dep_ref[...], w_pd_ref[...],
                 preferred_element_type=f32) + b_pd_ref[...]
    x = jnp.concatenate([xr, xd], axis=0)                 # (R, T)

    # ---- shared LayerNorm statistics (LN_v / LN_l normalize the same x) ----
    mu = jnp.mean(x, axis=-1, keepdims=True)
    xc = x - mu
    var = jnp.mean(xc * xc, axis=-1, keepdims=True)
    x_hat = xc * jax.lax.rsqrt(var + 1e-5)                # (R, T) f32

    v = x_hat * lnv_w_ref[...] + lnv_b_ref[...]           # residual branch

    # ---- fused Q|K|V projection (LN affines & q-scale pre-folded) ----------
    qkv = jnp.dot(x_hat.astype(md), w_qkv_ref[...],
                  preferred_element_type=f32) + b_qkv_ref[...]   # (R, 3T) f32

    # Hoisted casts / single K transpose (once per step, not per head).
    q_all = qkv[:, :T].astype(md)                         # (R, T)
    kT = qkv[:, T:2 * T].T.astype(md)                     # (T, R)
    v_all = qkv[:, 2 * T:].astype(md)                     # (R, T)
    wo = wo_ref[...]
    mask = mask_ref[...] if block_batch > 1 else None

    # ---- attention: all folded rows at once, heads fused into one loop -----
    # The additive block-diagonal mask keeps each softmax row inside its own
    # batch element, so this equals per-batch attention exactly.  Per-head
    # row softmax == the reference softmax (row-wise); the reference's
    # global-max shift and +-50000 clip only change values whose exp
    # underflows, so both were dropped (perf review).
    delta = None
    for h in range(H):
        lo = h * hd
        s = jnp.dot(q_all[:, lo:lo + hd], kT[lo:lo + hd, :],
                    preferred_element_type=f32)           # (R, R)
        if mask is not None:
            s = s + mask
        s = s - jnp.max(s, axis=-1, keepdims=True)
        p = jnp.exp(s)
        denom = jnp.sum(p, axis=-1, keepdims=True)
        r = pl.reciprocal(denom, approx=True)             # EUP slot
        r = r * (2.0 - denom * r)                         # one Newton step -> ~f32
        p = (p * r).astype(md)
        ctx = jnp.dot(p, v_all[:, lo:lo + hd],
                      preferred_element_type=f32)         # (R, hd)
        d_h = jnp.dot(ctx.astype(md), wo[lo:lo + hd, :],
                      preferred_element_type=f32)         # (R, T)
        delta = d_h if delta is None else delta + d_h
    delta = delta + bo_ref[...]

    # TODO(synk): attention dropout(p=0.1) / DropPath are eval-mode identities
    # here (no RNG path in the kernel).
    y = v + gamma_ref[...] * delta                        # (R, T) f32
    out_rgb_ref[...] = y[:Rr].astype(out_rgb_ref.dtype)
    out_dep_ref[...] = y[Rr:].astype(out_dep_ref.dtype)


# ---------------------------------------------------------------------------
# Wrapper: batch folding, param folding, grid/BlockSpecs.
# ---------------------------------------------------------------------------
def transfuser_forward(params, rgb, depth, *, matmul_dtype=jnp.bfloat16,
                       block_batch=None):
    B, Sr, Cv = rgb.shape
    Bd, Sd, Cd = depth.shape
    assert B == Bd
    T = params['w_pv'].shape[1]
    H = params['num_heads']
    assert T % H == 0
    hd = T // H
    S = Sr + Sd
    scale = float(hd) ** -0.5
    f32 = jnp.float32
    md = matmul_dtype

    # ---- batch folding: fill the MXU/VPU row dimension ---------------------
    if block_batch is None:
        target = max(1, pl.cdiv(128, S))      # aim for ~128 LHS rows per step
        block_batch = 1
        for d in range(1, B + 1):
            if B % d == 0 and d <= target:
                block_batch = d
    Bb = block_batch
    assert B % Bb == 0, "block_batch must divide the batch size"
    steps = B // Bb
    Rr, Rd = Bb * Sr, Bb * Sd
    R = Rr + Rd

    # ---- fold LN affines and the query scale into the fused QKV weight -----
    gv, bv = params['lnv_w'][0], params['lnv_b'][0]
    gl, bl = params['lnl_w'][0], params['lnl_b'][0]
    wq = (gv[:, None] * params['wq']) * scale
    bq = (bv @ params['wq'] + params['bq'][0]) * scale
    wk = gl[:, None] * params['wk']
    bk = bl @ params['wk'] + params['bk'][0]
    wv = gl[:, None] * params['wvl']
    bvl = bl @ params['wvl'] + params['bvl'][0]
    w_qkv = jnp.concatenate([wq, wk, wv], axis=1).astype(md)      # (T, 3T)
    b_qkv = jnp.concatenate([bq, bk, bvl])[None, :].astype(f32)   # (1, 3T)

    # ---- MXU operands stored in the matmul dtype (halves DMA for bf16) -----
    rgb_flat = rgb.reshape(B * Sr, Cv).astype(md)
    dep_flat = depth.reshape(B * Sd, Cd).astype(md)
    w_pv = params['w_pv'].astype(md)
    w_pd = params['w_pd'].astype(md)
    wo = params['wo'].astype(md)

    # Additive block-diagonal batch mask for the folded rows
    # (rows ordered [rgb slab (batch-major) | depth slab (batch-major)]).
    seg = jnp.concatenate([jnp.repeat(jnp.arange(Bb), Sr),
                           jnp.repeat(jnp.arange(Bb), Sd)])
    batch_mask = jnp.where(seg[:, None] == seg[None, :],
                           0.0, -1e30).astype(f32)                # (R, R)

    kernel = functools.partial(
        _transfuser_kernel, num_heads=H, head_dim=hd,
        block_batch=Bb, matmul_dtype=md)

    md_bytes = jnp.dtype(md).itemsize
    flops = steps * (2 * (Rr * Cv + Rd * Cd) * T
                     + 6 * R * T * T            # fused QKV
                     + 4 * R * R * T            # scores + context (all heads)
                     + 2 * R * T * T            # per-head out-proj, summed
                     + 10 * R * T)              # LN / residual / affine
    trans = steps * (H * R * R + H * R + R)
    bytes_acc = ((B * Sr * Cv + B * Sd * Cd) * md_bytes
                 + (Cv + Cd + 4 * T) * T * md_bytes
                 + (9 * T + R * R) * 4
                 + B * S * T * 4)
    cost = pl.CostEstimate(flops=int(flops), transcendentals=int(trans),
                           bytes_accessed=int(bytes_acc))

    def rep(shape):  # weights: same block for every grid step (not re-DMA'd)
        nd = len(shape)
        return pl.BlockSpec(shape, lambda i, _nd=nd: (0,) * _nd)

    in_specs = [
        pl.BlockSpec((Rr, Cv), lambda i: (i, 0)),
        pl.BlockSpec((Rd, Cd), lambda i: (i, 0)),
        rep((Cv, T)), rep((1, T)),
        rep((Cd, T)), rep((1, T)),
        rep((T, 3 * T)), rep((1, 3 * T)),
        rep((1, T)), rep((1, T)),
        rep((T, T)), rep((1, T)),
        rep((1, T)),
        rep((R, R)),
    ]
    out_specs = [
        pl.BlockSpec((Rr, T), lambda i: (i, 0)),
        pl.BlockSpec((Rd, T), lambda i: (i, 0)),
    ]
    # TODO(synk): for production-sized S, tile the attention flash-style over
    # KV blocks (the (R,R) score tile grows O(S^2)) and single-buffer the
    # constant-index weight specs to respect v7x's 64 MiB VMEM.

    out_rgb, out_dep = pl.pallas_call(
        kernel,
        out_shape=(jax.ShapeDtypeStruct((B * Sr, T), f32),
                   jax.ShapeDtypeStruct((B * Sd, T), f32)),
        grid_spec=pltpu.PrefetchScalarGridSpec(
            num_scalar_prefetch=0,
            grid=(steps,),
            in_specs=in_specs,
            out_specs=out_specs),
        compiler_params=pltpu.CompilerParams(
            dimension_semantics=("parallel",)),
        cost_estimate=cost,
    )(rgb_flat, dep_flat, w_pv, params['b_pv'], w_pd, params['b_pd'],
      w_qkv, b_qkv, params['lnv_w'], params['lnv_b'],
      wo, params['bo'], params['gamma'], batch_mask)

    return jnp.concatenate([out_rgb.reshape(B, Sr, T),
                            out_dep.reshape(B, Sd, T)], axis=1)


# ---------------------------------------------------------------------------
# Deterministic parameter init (biases / LN affines / gamma get small nonzero
# values so the folded-affine and attention paths are genuinely exercised).
# ---------------------------------------------------------------------------
def _xavier(key, fan_in, fan_out):
    bound = math.sqrt(6.0 / (fan_in + fan_out))
    # stored as (in, out): kernel computes x @ W + b  (== PyTorch x @ W.T + b)
    return jax.random.uniform(key, (fan_in, fan_out), jnp.float32, -bound, bound)


def init_params(key, vis_channels, depth_channels, tgt_channels, num_heads):
    T = tgt_channels
    keys = jax.random.split(key, 16)

    def small(k, shape, s=0.1):
        return s * jax.random.normal(k, shape, jnp.float32)

    return dict(
        num_heads=num_heads,
        w_pv=_xavier(keys[0], vis_channels, T), b_pv=small(keys[1], (1, T)),
        w_pd=_xavier(keys[2], depth_channels, T), b_pd=small(keys[3], (1, T)),
        lnv_w=1.0 + small(keys[4], (1, T)), lnv_b=small(keys[5], (1, T)),
        lnl_w=1.0 + small(keys[6], (1, T)), lnl_b=small(keys[7], (1, T)),
        wq=_xavier(keys[8], T, T), bq=small(keys[9], (1, T)),
        wk=_xavier(keys[10], T, T), bk=small(keys[11], (1, T)),
        wvl=_xavier(keys[12], T, T), bvl=small(keys[13], (1, T)),
        wo=_xavier(keys[14], T, T), bo=small(keys[15], (1, T)),
        gamma=0.1 * jnp.ones((1, T), jnp.float32),
    )


# ---------------------------------------------------------------------------
# Pure-JAX reference (mirrors the PyTorch forward exactly) for validation.
# ---------------------------------------------------------------------------
def reference(params, rgb, depth):
    H = params['num_heads']
    pr = rgb @ params['w_pv'] + params['b_pv'][0]
    pd = depth @ params['w_pd'] + params['b_pd'][0]
    x = jnp.concatenate([pr, pd], axis=1)

    def ln(y, w, b):
        mu = y.mean(-1, keepdims=True)
        var = ((y - mu) ** 2).mean(-1, keepdims=True)
        return (y - mu) / jnp.sqrt(var + 1e-5) * w + b

    v = ln(x, params['lnv_w'][0], params['lnv_b'][0])
    l = ln(x, params['lnl_w'][0], params['lnl_b'][0])

    B, S, T = v.shape
    hd = T // H
    scale = hd ** -0.5
    q = (v @ params['wq'] + params['bq'][0]) * scale
    k = l @ params['wk'] + params['bk'][0]
    vl = l @ params['wvl'] + params['bvl'][0]

    qh = q.reshape(B, S, H, hd).transpose(0, 2, 1, 3)
    kh = k.reshape(B, S, H, hd).transpose(0, 2, 1, 3)
    vh = vl.reshape(B, S, H, hd).transpose(0, 2, 1, 3)

    scores = jnp.einsum('bhqd,bhkd->bhqk', qh, kh)
    scores = jnp.clip(scores - scores.max(), -50000.0, 50000.0)
    p = jax.nn.softmax(scores, axis=-1)
    ctx = jnp.einsum('bhqk,bhkd->bhqd', p, vh)
    ctx = ctx.transpose(0, 2, 1, 3).reshape(B, S, T)
    delta = ctx @ params['wo'] + params['bo'][0]
    return v + params['gamma'][0] * delta


# ---------------------------------------------------------------------------
if __name__ == "__main__":
    B, S_rgb, S_depth = 2, 8, 8
    vis_channels, depth_channels, tgt_channels, num_heads = 16, 8, 32, 4

    key = jax.random.PRNGKey(0)
    k_params, k_rgb, k_depth = jax.random.split(key, 3)

    params = init_params(k_params, vis_channels, depth_channels,
                         tgt_channels, num_heads)
    rgb = jax.random.normal(k_rgb, (B, S_rgb, vis_channels), jnp.float32)
    depth = jax.random.normal(k_depth, (B, S_depth, depth_channels), jnp.float32)

    ref = reference(params, rgb, depth)

    # f32 MXU path: strict check against the reference.
    out_f32 = transfuser_forward(params, rgb, depth, matmul_dtype=jnp.float32)
    jax.block_until_ready(out_f32)
    assert out_f32.shape == (B, S_rgb + S_depth, tgt_channels)
    assert jnp.allclose(out_f32, ref, atol=1e-4, rtol=1e-4), "f32 mismatch"

    # Default bf16 MXU path (f32 accumulation, LN/softmax in f32): relaxed tol.
    out_bf16 = transfuser_forward(params, rgb, depth)
    jax.block_until_ready(out_bf16)
    assert out_bf16.shape == (B, S_rgb + S_depth, tgt_channels)
    assert jnp.allclose(out_bf16, ref, atol=5e-2, rtol=5e-2), "bf16 mismatch"

    print("KERNEL_OK")
</pallas_src>

<mosaic_0001>
module attributes {stable_mosaic.version = 11 : i64} {
  func.func @_transfuser_kernel(%arg0: i32, %arg1: memref<16x16xf32, #tpu.memory_space<vmem>>, %arg2: memref<16x8xf32, #tpu.memory_space<vmem>>, %arg3: memref<16x32xf32, #tpu.memory_space<vmem>>, %arg4: memref<1x32xf32, #tpu.memory_space<vmem>>, %arg5: memref<8x32xf32, #tpu.memory_space<vmem>>, %arg6: memref<1x32xf32, #tpu.memory_space<vmem>>, %arg7: memref<32x96xf32, #tpu.memory_space<vmem>>, %arg8: memref<1x96xf32, #tpu.memory_space<vmem>>, %arg9: memref<1x32xf32, #tpu.memory_space<vmem>>, %arg10: memref<1x32xf32, #tpu.memory_space<vmem>>, %arg11: memref<32x32xf32, #tpu.memory_space<vmem>>, %arg12: memref<1x32xf32, #tpu.memory_space<vmem>>, %arg13: memref<1x32xf32, #tpu.memory_space<vmem>>, %arg14: memref<32x32xf32, #tpu.memory_space<vmem>>, %arg15: memref<16x32xf32, #tpu.memory_space<vmem>>, %arg16: memref<16x32xf32, #tpu.memory_space<vmem>>) attributes {dimension_semantics = [#tpu.dimension_semantics<parallel>], iteration_bounds = array<i64: 1>, scalar_prefetch = 0 : i64, scratch_operands = 0 : i64, tpu.core_type = #tpu.core_type<tc>, window_params = [{transform_indices = @transform_0, window_bounds = array<i64: 16, 16>}, {transform_indices = @transform_1, window_bounds = array<i64: 16, 8>}, {pipeline_mode = #tpu.pipeline_mode<synchronous>, transform_indices = @transform_2, window_bounds = array<i64: 16, 32>}, {pipeline_mode = #tpu.pipeline_mode<synchronous>, transform_indices = @transform_3, window_bounds = array<i64: 1, 32>}, {pipeline_mode = #tpu.pipeline_mode<synchronous>, transform_indices = @transform_4, window_bounds = array<i64: 8, 32>}, {pipeline_mode = #tpu.pipeline_mode<synchronous>, transform_indices = @transform_5, window_bounds = array<i64: 1, 32>}, {pipeline_mode = #tpu.pipeline_mode<synchronous>, transform_indices = @transform_6, window_bounds = array<i64: 32, 96>}, {pipeline_mode = #tpu.pipeline_mode<synchronous>, transform_indices = @transform_7, window_bounds = array<i64: 1, 96>}, {pipeline_mode = #tpu.pipeline_mode<synchronous>, transform_indices = @transform_8, window_bounds = array<i64: 1, 32>}, {pipeline_mode = #tpu.pipeline_mode<synchronous>, transform_indices = @transform_9, window_bounds = array<i64: 1, 32>}, {pipeline_mode = #tpu.pipeline_mode<synchronous>, transform_indices = @transform_10, window_bounds = array<i64: 32, 32>}, {pipeline_mode = #tpu.pipeline_mode<synchronous>, transform_indices = @transform_11, window_bounds = array<i64: 1, 32>}, {pipeline_mode = #tpu.pipeline_mode<synchronous>, transform_indices = @transform_12, window_bounds = array<i64: 1, 32>}, {pipeline_mode = #tpu.pipeline_mode<synchronous>, transform_indices = @transform_13, window_bounds = array<i64: 32, 32>}, {transform_indices = @transform_14, window_bounds = array<i64: 16, 32>}, {transform_indices = @transform_15, window_bounds = array<i64: 16, 32>}]} {
    %c0 = arith.constant 0 : index
    %c0_0 = arith.constant 0 : index
    %0 = vector.load %arg1[%c0, %c0_0] : memref<16x16xf32, #tpu.memory_space<vmem>>, vector<16x16xf32>
    %c0_1 = arith.constant 0 : index
    %c0_2 = arith.constant 0 : index
    %1 = vector.load %arg3[%c0_1, %c0_2] : memref<16x32xf32, #tpu.memory_space<vmem>>, vector<16x32xf32>
    %cst = arith.constant dense<0.000000e+00> : vector<16x32xf32>
    %2 = tpu.matmul %0, %1, %cst {dimension_numbers = #tpu.dot_dimension_numbers<[1], [0], [0], [1], [0, 0, 1, 1], [], []>} : vector<16x16xf32>, vector<16x32xf32>, vector<16x32xf32> -> vector<16x32xf32>
    %c0_3 = arith.constant 0 : index
    %c0_4 = arith.constant 0 : index
    %3 = vector.load %arg4[%c0_3, %c0_4] : memref<1x32xf32, #tpu.memory_space<vmem>>, vector<1x32xf32>
    %4 = vector.broadcast %3 : vector<1x32xf32> to vector<16x32xf32>
    %5 = arith.addf %2, %4 : vector<16x32xf32>
    %c0_5 = arith.constant 0 : index
    %c0_6 = arith.constant 0 : index
    %6 = vector.load %arg2[%c0_5, %c0_6] : memref<16x8xf32, #tpu.memory_space<vmem>>, vector<16x8xf32>
    %c0_7 = arith.constant 0 : index
    %c0_8 = arith.constant 0 : index
    %7 = vector.load %arg5[%c0_7, %c0_8] : memref<8x32xf32, #tpu.memory_space<vmem>>, vector<8x32xf32>
    %cst_9 = arith.constant dense<0.000000e+00> : vector<16x32xf32>
    %8 = tpu.matmul %6, %7, %cst_9 {dimension_numbers = #tpu.dot_dimension_numbers<[1], [0], [0], [1], [0, 0, 1, 1], [], []>} : vector<16x8xf32>, vector<8x32xf32>, vector<16x32xf32> -> vector<16x32xf32>
    %c0_10 = arith.constant 0 : index
    %c0_11 = arith.constant 0 : index
    %9 = vector.load %arg6[%c0_10, %c0_11] : memref<1x32xf32, #tpu.memory_space<vmem>>, vector<1x32xf32>
    %10 = vector.broadcast %9 : vector<1x32xf32> to vector<16x32xf32>
    %11 = arith.addf %8, %10 : vector<16x32xf32>
    %12 = tpu.concatenate %5, %11 in 0 : vector<16x32xf32>, vector<16x32xf32> -> vector<32x32xf32>
    %cst_12 = arith.constant dense<0.000000e+00> : vector<32xf32>
    %13 = vector.multi_reduction <add>, %12, %cst_12 [1] : vector<32x32xf32> to vector<32xf32>
    %14 = vector.shape_cast %13 : vector<32xf32> to vector<32x1xf32>
    %cst_13 = arith.constant 3.200000e+01 : f32
    %15 = vector.broadcast %cst_13 : f32 to vector<32x1xf32>
    %16 = arith.divf %14, %15 : vector<32x1xf32>
    %17 = vector.broadcast %16 : vector<32x1xf32> to vector<32x32xf32>
    %18 = arith.subf %12, %17 : vector<32x32xf32>
    %19 = arith.mulf %18, %18 : vector<32x32xf32>
    %cst_14 = arith.constant dense<0.000000e+00> : vector<32xf32>
    %20 = vector.multi_reduction <add>, %19, %cst_14 [1] : vector<32x32xf32> to vector<32xf32>
    %21 = vector.shape_cast %20 : vector<32xf32> to vector<32x1xf32>
    %cst_15 = arith.constant 3.200000e+01 : f32
    %22 = vector.broadcast %cst_15 : f32 to vector<32x1xf32>
    %23 = arith.divf %21, %22 : vector<32x1xf32>
    %cst_16 = arith.constant 9.99999974E-6 : f32
    %24 = vector.broadcast %cst_16 : f32 to vector<32x1xf32>
    %25 = arith.addf %23, %24 : vector<32x1xf32>
    %26 = math.rsqrt %25 : vector<32x1xf32>
    %27 = vector.broadcast %26 : vector<32x1xf32> to vector<32x32xf32>
    %28 = arith.mulf %18, %27 : vector<32x32xf32>
    %c0_17 = arith.constant 0 : index
    %c0_18 = arith.constant 0 : index
    %29 = vector.load %arg9[%c0_17, %c0_18] : memref<1x32xf32, #tpu.memory_space<vmem>>, vector<1x32xf32>
    %30 = vector.broadcast %29 : vector<1x32xf32> to vector<32x32xf32>
    %31 = arith.mulf %28, %30 : vector<32x32xf32>
    %c0_19 = arith.constant 0 : index
    %c0_20 = arith.constant 0 : index
    %32 = vector.load %arg10[%c0_19, %c0_20] : memref<1x32xf32, #tpu.memory_space<vmem>>, vector<1x32xf32>
    %33 = vector.broadcast %32 : vector<1x32xf32> to vector<32x32xf32>
    %34 = arith.addf %31, %33 : vector<32x32xf32>
    %c0_21 = arith.constant 0 : index
    %c0_22 = arith.constant 0 : index
    %35 = vector.load %arg7[%c0_21, %c0_22] : memref<32x96xf32, #tpu.memory_space<vmem>>, vector<32x96xf32>
    %cst_23 = arith.constant dense<0.000000e+00> : vector<32x96xf32>
    %36 = tpu.matmul %28, %35, %cst_23 {dimension_numbers = #tpu.dot_dimension_numbers<[1], [0], [0], [1], [0, 0, 1, 1], [], []>} : vector<32x32xf32>, vector<32x96xf32>, vector<32x96xf32> -> vector<32x96xf32>
    %c0_24 = arith.constant 0 : index
    %c0_25 = arith.constant 0 : index
    %37 = vector.load %arg8[%c0_24, %c0_25] : memref<1x96xf32, #tpu.memory_space<vmem>>, vector<1x96xf32>
    %38 = vector.broadcast %37 : vector<1x96xf32> to vector<32x96xf32>
    %39 = arith.addf %36, %38 : vector<32x96xf32>
    %40 = vector.extract_strided_slice %39 {offsets = [0, 0], sizes = [32, 32], strides = [1, 1]} : vector<32x96xf32> to vector<32x32xf32>
    %41 = vector.extract_strided_slice %39 {offsets = [0, 32], sizes = [32, 32], strides = [1, 1]} : vector<32x96xf32> to vector<32x32xf32>
    %42 = tpu.transpose %41, [1, 0] : vector<32x32xf32> -> vector<32x32xf32>
    %43 = vector.extract_strided_slice %39 {offsets = [0, 64], sizes = [32, 32], strides = [1, 1]} : vector<32x96xf32> to vector<32x32xf32>
    %c0_26 = arith.constant 0 : index
    %c0_27 = arith.constant 0 : index
    %44 = vector.load %arg11[%c0_26, %c0_27] : memref<32x32xf32, #tpu.memory_space<vmem>>, vector<32x32xf32>
    %c0_28 = arith.constant 0 : index
    %c0_29 = arith.constant 0 : index
    %45 = vector.load %arg14[%c0_28, %c0_29] : memref<32x32xf32, #tpu.memory_space<vmem>>, vector<32x32xf32>
    %46 = vector.extract_strided_slice %40 {offsets = [0, 0], sizes = [32, 8], strides = [1, 1]} : vector<32x32xf32> to vector<32x8xf32>
    %47 = vector.extract_strided_slice %42 {offsets = [0, 0], sizes = [8, 32], strides = [1, 1]} : vector<32x32xf32> to vector<8x32xf32>
    %cst_30 = arith.constant dense<0.000000e+00> : vector<32x32xf32>
    %48 = tpu.matmul %46, %47, %cst_30 {dimension_numbers = #tpu.dot_dimension_numbers<[1], [0], [0], [1], [0, 0, 1, 1], [], []>} : vector<32x8xf32>, vector<8x32xf32>, vector<32x32xf32> -> vector<32x32xf32>
    %49 = arith.addf %48, %45 : vector<32x32xf32>
    %cst_31 = arith.constant dense<0xFF800000> : vector<32xf32>
    %50 = vector.multi_reduction <maximumf>, %49, %cst_31 [1] : vector<32x32xf32> to vector<32xf32>
    %51 = vector.shape_cast %50 : vector<32xf32> to vector<32x1xf32>
    %52 = vector.broadcast %51 : vector<32x1xf32> to vector<32x32xf32>
    %53 = arith.subf %49, %52 : vector<32x32xf32>
    %54 = math.exp %53 : vector<32x32xf32>
    %cst_32 = arith.constant dense<0.000000e+00> : vector<32xf32>
    %55 = vector.multi_reduction <add>, %54, %cst_32 [1] : vector<32x32xf32> to vector<32xf32>
    %56 = vector.shape_cast %55 : vector<32xf32> to vector<32x1xf32>
    %57 = tpu.reciprocal %56 {approx = true} : vector<32x1xf32> -> vector<32x1xf32>
    %58 = arith.mulf %56, %57 : vector<32x1xf32>
    %cst_33 = arith.constant 2.000000e+00 : f32
    %59 = vector.broadcast %cst_33 : f32 to vector<32x1xf32>
    %60 = arith.subf %59, %58 : vector<32x1xf32>
    %61 = arith.mulf %57, %60 : vector<32x1xf32>
    %62 = vector.broadcast %61 : vector<32x1xf32> to vector<32x32xf32>
    %63 = arith.mulf %54, %62 : vector<32x32xf32>
    %64 = vector.extract_strided_slice %43 {offsets = [0, 0], sizes = [32, 8], strides = [1, 1]} : vector<32x32xf32> to vector<32x8xf32>
    %cst_34 = arith.constant dense<0.000000e+00> : vector<32x8xf32>
    %65 = tpu.matmul %63, %64, %cst_34 {dimension_numbers = #tpu.dot_dimension_numbers<[1], [0], [0], [1], [0, 0, 1, 1], [], []>} : vector<32x32xf32>, vector<32x8xf32>, vector<32x8xf32> -> vector<32x8xf32>
    %66 = vector.extract_strided_slice %44 {offsets = [0, 0], sizes = [8, 32], strides = [1, 1]} : vector<32x32xf32> to vector<8x32xf32>
    %cst_35 = arith.constant dense<0.000000e+00> : vector<32x32xf32>
    %67 = tpu.matmul %65, %66, %cst_35 {dimension_numbers = #tpu.dot_dimension_numbers<[1], [0], [0], [1], [0, 0, 1, 1], [], []>} : vector<32x8xf32>, vector<8x32xf32>, vector<32x32xf32> -> vector<32x32xf32>
    %68 = vector.extract_strided_slice %40 {offsets = [0, 8], sizes = [32, 8], strides = [1, 1]} : vector<32x32xf32> to vector<32x8xf32>
    %69 = vector.extract_strided_slice %42 {offsets = [8, 0], sizes = [8, 32], strides = [1, 1]} : vector<32x32xf32> to vector<8x32xf32>
    %cst_36 = arith.constant dense<0.000000e+00> : vector<32x32xf32>
    %70 = tpu.matmul %68, %69, %cst_36 {dimension_numbers = #tpu.dot_dimension_numbers<[1], [0], [0], [1], [0, 0, 1, 1], [], []>} : vector<32x8xf32>, vector<8x32xf32>, vector<32x32xf32> -> vector<32x32xf32>
    %71 = arith.addf %70, %45 : vector<32x32xf32>
    %cst_37 = arith.constant dense<0xFF800000> : vector<32xf32>
    %72 = vector.multi_reduction <maximumf>, %71, %cst_37 [1] : vector<32x32xf32> to vector<32xf32>
    %73 = vector.shape_cast %72 : vector<32xf32> to vector<32x1xf32>
    %74 = vector.broadcast %73 : vector<32x1xf32> to vector<32x32xf32>
    %75 = arith.subf %71, %74 : vector<32x32xf32>
    %76 = math.exp %75 : vector<32x32xf32>
    %cst_38 = arith.constant dense<0.000000e+00> : vector<32xf32>
    %77 = vector.multi_reduction <add>, %76, %cst_38 [1] : vector<32x32xf32> to vector<32xf32>
    %78 = vector.shape_cast %77 : vector<32xf32> to vector<32x1xf32>
    %79 = tpu.reciprocal %78 {approx = true} : vector<32x1xf32> -> vector<32x1xf32>
    %80 = arith.mulf %78, %79 : vector<32x1xf32>
    %cst_39 = arith.constant 2.000000e+00 : f32
    %81 = vector.broadcast %cst_39 : f32 to vector<32x1xf32>
    %82 = arith.subf %81, %80 : vector<32x1xf32>
    %83 = arith.mulf %79, %82 : vector<32x1xf32>
    %84 = vector.broadcast %83 : vector<32x1xf32> to vector<32x32xf32>
    %85 = arith.mulf %76, %84 : vector<32x32xf32>
    %86 = vector.extract_strided_slice %43 {offsets = [0, 8], sizes = [32, 8], strides = [1, 1]} : vector<32x32xf32> to vector<32x8xf32>
    %cst_40 = arith.constant dense<0.000000e+00> : vector<32x8xf32>
    %87 = tpu.matmul %85, %86, %cst_40 {dimension_numbers = #tpu.dot_dimension_numbers<[1], [0], [0], [1], [0, 0, 1, 1], [], []>} : vector<32x32xf32>, vector<32x8xf32>, vector<32x8xf32> -> vector<32x8xf32>
    %88 = vector.extract_strided_slice %44 {offsets = [8, 0], sizes = [8, 32], strides = [1, 1]} : vector<32x32xf32> to vector<8x32xf32>
    %cst_41 = arith.constant dense<0.000000e+00> : vector<32x32xf32>
    %89 = tpu.matmul %87, %88, %cst_41 {dimension_numbers = #tpu.dot_dimension_numbers<[1], [0], [0], [1], [0, 0, 1, 1], [], []>} : vector<32x8xf32>, vector<8x32xf32>, vector<32x32xf32> -> vector<32x32xf32>
    %90 = arith.addf %67, %89 : vector<32x32xf32>
    %91 = vector.extract_strided_slice %40 {offsets = [0, 16], sizes = [32, 8], strides = [1, 1]} : vector<32x32xf32> to vector<32x8xf32>
    %92 = vector.extract_strided_slice %42 {offsets = [16, 0], sizes = [8, 32], strides = [1, 1]} : vector<32x32xf32> to vector<8x32xf32>
    %cst_42 = arith.constant dense<0.000000e+00> : vector<32x32xf32>
    %93 = tpu.matmul %91, %92, %cst_42 {dimension_numbers = #tpu.dot_dimension_numbers<[1], [0], [0], [1], [0, 0, 1, 1], [], []>} : vector<32x8xf32>, vector<8x32xf32>, vector<32x32xf32> -> vector<32x32xf32>
    %94 = arith.addf %93, %45 : vector<32x32xf32>
    %cst_43 = arith.constant dense<0xFF800000> : vector<32xf32>
    %95 = vector.multi_reduction <maximumf>, %94, %cst_43 [1] : vector<32x32xf32> to vector<32xf32>
    %96 = vector.shape_cast %95 : vector<32xf32> to vector<32x1xf32>
    %97 = vector.broadcast %96 : vector<32x1xf32> to vector<32x32xf32>
    %98 = arith.subf %94, %97 : vector<32x32xf32>
    %99 = math.exp %98 : vector<32x32xf32>
    %cst_44 = arith.constant dense<0.000000e+00> : vector<32xf32>
    %100 = vector.multi_reduction <add>, %99, %cst_44 [1] : vector<32x32xf32> to vector<32xf32>
    %101 = vector.shape_cast %100 : vector<32xf32> to vector<32x1xf32>
    %102 = tpu.reciprocal %101 {approx = true} : vector<32x1xf32> -> vector<32x1xf32>
    %103 = arith.mulf %101, %102 : vector<32x1xf32>
    %cst_45 = arith.constant 2.000000e+00 : f32
    %104 = vector.broadcast %cst_45 : f32 to vector<32x1xf32>
    %105 = arith.subf %104, %103 : vector<32x1xf32>
    %106 = arith.mulf %102, %105 : vector<32x1xf32>
    %107 = vector.broadcast %106 : vector<32x1xf32> to vector<32x32xf32>
    %108 = arith.mulf %99, %107 : vector<32x32xf32>
    %109 = vector.extract_strided_slice %43 {offsets = [0, 16], sizes = [32, 8], strides = [1, 1]} : vector<32x32xf32> to vector<32x8xf32>
    %cst_46 = arith.constant dense<0.000000e+00> : vector<32x8xf32>
    %110 = tpu.matmul %108, %109, %cst_46 {dimension_numbers = #tpu.dot_dimension_numbers<[1], [0], [0], [1], [0, 0, 1, 1], [], []>} : vector<32x32xf32>, vector<32x8xf32>, vector<32x8xf32> -> vector<32x8xf32>
    %111 = vector.extract_strided_slice %44 {offsets = [16, 0], sizes = [8, 32], strides = [1, 1]} : vector<32x32xf32> to vector<8x32xf32>
    %cst_47 = arith.constant dense<0.000000e+00> : vector<32x32xf32>
    %112 = tpu.matmul %110, %111, %cst_47 {dimension_numbers = #tpu.dot_dimension_numbers<[1], [0], [0], [1], [0, 0, 1, 1], [], []>} : vector<32x8xf32>, vector<8x32xf32>, vector<32x32xf32> -> vector<32x32xf32>
    %113 = arith.addf %90, %112 : vector<32x32xf32>
    %114 = vector.extract_strided_slice %40 {offsets = [0, 24], sizes = [32, 8], strides = [1, 1]} : vector<32x32xf32> to vector<32x8xf32>
    %115 = vector.extract_strided_slice %42 {offsets = [24, 0], sizes = [8, 32], strides = [1, 1]} : vector<32x32xf32> to vector<8x32xf32>
    %cst_48 = arith.constant dense<0.000000e+00> : vector<32x32xf32>
    %116 = tpu.matmul %114, %115, %cst_48 {dimension_numbers = #tpu.dot_dimension_numbers<[1], [0], [0], [1], [0, 0, 1, 1], [], []>} : vector<32x8xf32>, vector<8x32xf32>, vector<32x32xf32> -> vector<32x32xf32>
    %117 = arith.addf %116, %45 : vector<32x32xf32>
    %cst_49 = arith.constant dense<0xFF800000> : vector<32xf32>
    %118 = vector.multi_reduction <maximumf>, %117, %cst_49 [1] : vector<32x32xf32> to vector<32xf32>
    %119 = vector.shape_cast %118 : vector<32xf32> to vector<32x1xf32>
    %120 = vector.broadcast %119 : vector<32x1xf32> to vector<32x32xf32>
    %121 = arith.subf %117, %120 : vector<32x32xf32>
    %122 = math.exp %121 : vector<32x32xf32>
    %cst_50 = arith.constant dense<0.000000e+00> : vector<32xf32>
    %123 = vector.multi_reduction <add>, %122, %cst_50 [1] : vector<32x32xf32> to vector<32xf32>
    %124 = vector.shape_cast %123 : vector<32xf32> to vector<32x1xf32>
    %125 = tpu.reciprocal %124 {approx = true} : vector<32x1xf32> -> vector<32x1xf32>
    %126 = arith.mulf %124, %125 : vector<32x1xf32>
    %cst_51 = arith.constant 2.000000e+00 : f32
    %127 = vector.broadcast %cst_51 : f32 to vector<32x1xf32>
    %128 = arith.subf %127, %126 : vector<32x1xf32>
    %129 = arith.mulf %125, %128 : vector<32x1xf32>
    %130 = vector.broadcast %129 : vector<32x1xf32> to vector<32x32xf32>
    %131 = arith.mulf %122, %130 : vector<32x32xf32>
    %132 = vector.extract_strided_slice %43 {offsets = [0, 24], sizes = [32, 8], strides = [1, 1]} : vector<32x32xf32> to vector<32x8xf32>
    %cst_52 = arith.constant dense<0.000000e+00> : vector<32x8xf32>
    %133 = tpu.matmul %131, %132, %cst_52 {dimension_numbers = #tpu.dot_dimension_numbers<[1], [0], [0], [1], [0, 0, 1, 1], [], []>} : vector<32x32xf32>, vector<32x8xf32>, vector<32x8xf32> -> vector<32x8xf32>
    %134 = vector.extract_strided_slice %44 {offsets = [24, 0], sizes = [8, 32], strides = [1, 1]} : vector<32x32xf32> to vector<8x32xf32>
    %cst_53 = arith.constant dense<0.000000e+00> : vector<32x32xf32>
    %135 = tpu.matmul %133, %134, %cst_53 {dimension_numbers = #tpu.dot_dimension_numbers<[1], [0], [0], [1], [0, 0, 1, 1], [], []>} : vector<32x8xf32>, vector<8x32xf32>, vector<32x32xf32> -> vector<32x32xf32>
    %136 = arith.addf %113, %135 : vector<32x32xf32>
    %c0_54 = arith.constant 0 : index
    %c0_55 = arith.constant 0 : index
    %137 = vector.load %arg12[%c0_54, %c0_55] : memref<1x32xf32, #tpu.memory_space<vmem>>, vector<1x32xf32>
    %138 = vector.broadcast %137 : vector<1x32xf32> to vector<32x32xf32>
    %139 = arith.addf %136, %138 : vector<32x32xf32>
    %c0_56 = arith.constant 0 : index
    %c0_57 = arith.constant 0 : index
    %140 = vector.load %arg13[%c0_56, %c0_57] : memref<1x32xf32, #tpu.memory_space<vmem>>, vector<1x32xf32>
    %141 = vector.broadcast %140 : vector<1x32xf32> to vector<32x32xf32>
    %142 = arith.mulf %141, %139 : vector<32x32xf32>
    %143 = arith.addf %34, %142 : vector<32x32xf32>
    %144 = vector.extract_strided_slice %143 {offsets = [0, 0], sizes = [16, 32], strides = [1, 1]} : vector<32x32xf32> to vector<16x32xf32>
    %c0_58 = arith.constant 0 : index
    %c0_59 = arith.constant 0 : index
    %145 = vector.load %arg15[%c0_58, %c0_59] : memref<16x32xf32, #tpu.memory_space<vmem>>, vector<16x32xf32>
    tpu.vector_store %arg15[%c0_58, %c0_59], %144 {strides = array<i32>} : memref<16x32xf32, #tpu.memory_space<vmem>>, vector<16x32xf32>,
    %146 = vector.extract_strided_slice %143 {offsets = [16, 0], sizes = [16, 32], strides = [1, 1]} : vector<32x32xf32> to vector<16x32xf32>
    %c0_60 = arith.constant 0 : index
    %c0_61 = arith.constant 0 : index
    %147 = vector.load %arg16[%c0_60, %c0_61] : memref<16x32xf32, #tpu.memory_space<vmem>>, vector<16x32xf32>
    tpu.vector_store %arg16[%c0_60, %c0_61], %146 {strides = array<i32>} : memref<16x32xf32, #tpu.memory_space<vmem>>, vector<16x32xf32>,
    return
  }
  func.func @transform_0(%arg0: i32) -> (i32, i32) {
    %c0_i32 = arith.constant 0 : i32
    %c0_i32_0 = arith.constant 0 : i32
    return %arg0, %c0_i32 : i32, i32
  }
  func.func @transform_1(%arg0: i32) -> (i32, i32) {
    %c0_i32 = arith.constant 0 : i32
    %c0_i32_0 = arith.constant 0 : i32
    return %arg0, %c0_i32 : i32, i32
  }
  func.func @transform_2(%arg0: i32) -> (i32, i32) {
    %c0_i32 = arith.constant 0 : i32
    %c0_i32_0 = arith.constant 0 : i32
    %c0_i32_1 = arith.constant 0 : i32
    return %c0_i32, %c0_i32_0 : i32, i32
  }
  func.func @transform_3(%arg0: i32) -> (i32, i32) {
    %c0_i32 = arith.constant 0 : i32
    %c0_i32_0 = arith.constant 0 : i32
    %c0_i32_1 = arith.constant 0 : i32
    return %c0_i32, %c0_i32_0 : i32, i32
  }
  func.func @transform_4(%arg0: i32) -> (i32, i32) {
    %c0_i32 = arith.constant 0 : i32
    %c0_i32_0 = arith.constant 0 : i32
    %c0_i32_1 = arith.constant 0 : i32
    return %c0_i32, %c0_i32_0 : i32, i32
  }
  func.func @transform_5(%arg0: i32) -> (i32, i32) {
    %c0_i32 = arith.constant 0 : i32
    %c0_i32_0 = arith.constant 0 : i32
    %c0_i32_1 = arith.constant 0 : i32
    return %c0_i32, %c0_i32_0 : i32, i32
  }
  func.func @transform_6(%arg0: i32) -> (i32, i32) {
    %c0_i32 = arith.constant 0 : i32
    %c0_i32_0 = arith.constant 0 : i32
    %c0_i32_1 = arith.constant 0 : i32
    return %c0_i32, %c0_i32_0 : i32, i32
  }
  func.func @transform_7(%arg0: i32) -> (i32, i32) {
    %c0_i32 = arith.constant 0 : i32
    %c0_i32_0 = arith.constant 0 : i32
    %c0_i32_1 = arith.constant 0 : i32
    return %c0_i32, %c0_i32_0 : i32, i32
  }
  func.func @transform_8(%arg0: i32) -> (i32, i32) {
    %c0_i32 = arith.constant 0 : i32
    %c0_i32_0 = arith.constant 0 : i32
    %c0_i32_1 = arith.constant 0 : i32
    return %c0_i32, %c0_i32_0 : i32, i32
  }
  func.func @transform_9(%arg0: i32) -> (i32, i32) {
    %c0_i32 = arith.constant 0 : i32
    %c0_i32_0 = arith.constant 0 : i32
    %c0_i32_1 = arith.constant 0 : i32
    return %c0_i32, %c0_i32_0 : i32, i32
  }
  func.func @transform_10(%arg0: i32) -> (i32, i32) {
    %c0_i32 = arith.constant 0 : i32
    %c0_i32_0 = arith.constant 0 : i32
    %c0_i32_1 = arith.constant 0 : i32
    return %c0_i32, %c0_i32_0 : i32, i32
  }
  func.func @transform_11(%arg0: i32) -> (i32, i32) {
    %c0_i32 = arith.constant 0 : i32
    %c0_i32_0 = arith.constant 0 : i32
    %c0_i32_1 = arith.constant 0 : i32
    return %c0_i32, %c0_i32_0 : i32, i32
  }
  func.func @transform_12(%arg0: i32) -> (i32, i32) {
    %c0_i32 = arith.constant 0 : i32
    %c0_i32_0 = arith.constant 0 : i32
    %c0_i32_1 = arith.constant 0 : i32
    return %c0_i32, %c0_i32_0 : i32, i32
  }
  func.func @transform_13(%arg0: i32) -> (i32, i32) {
    %c0_i32 = arith.constant 0 : i32
    %c0_i32_0 = arith.constant 0 : i32
    %c0_i32_1 = arith.constant 0 : i32
    return %c0_i32, %c0_i32_0 : i32, i32
  }
  func.func @transform_14(%arg0: i32) -> (i32, i32) {
    %c0_i32 = arith.constant 0 : i32
    %c0_i32_0 = arith.constant 0 : i32
    return %arg0, %c0_i32 : i32, i32
  }
  func.func @transform_15(%arg0: i32) -> (i32, i32) {
    %c0_i32 = arith.constant 0 : i32
    %c0_i32_0 = arith.constant 0 : i32
    return %arg0, %c0_i32 : i32, i32
  }
}

</mosaic_0001>

<llo_original>
// kernel: tpu_custom_call.1
$region0: #{tpu_custom_call.1}
  #allocation0 [shape = 'u32[]', space=smem, size = 0x4, offset = 0x4, fixed_abs, tag = 'smem constant byte address 0x4 - core index']
  #allocation1 [shape = 'u32[72,128]{1,0:T(1,128)}', space=vmem, size = 0x9000, scoped, tag = 'internal scratch']
  %s0 = inlined_call_operand.hbm [shape: f32[16,16], index: 0, kind: input, shape index: {}]
  %s1 = inlined_call_operand.vmem [shape: f32[16,8], index: 1, kind: input, shape index: {}]
  %s2 = inlined_call_operand.hbm [shape: f32[16,32], index: 2, kind: input, shape index: {}]
  %s3 = inlined_call_operand.vmem [shape: f32[1,32], index: 3, kind: input, shape index: {}]
  %s4 = inlined_call_operand.hbm [shape: f32[8,32], index: 4, kind: input, shape index: {}]
  %s5 = inlined_call_operand.hbm [shape: f32[1,32], index: 5, kind: input, shape index: {}]
  %s6 = inlined_call_operand.hbm [shape: f32[32,96], index: 6, kind: input, shape index: {}]
  %s7 = inlined_call_operand.hbm [shape: f32[1,96], index: 7, kind: input, shape index: {}]
  %s8 = inlined_call_operand.hbm [shape: f32[1,32], index: 8, kind: input, shape index: {}]
  %s9 = inlined_call_operand.hbm [shape: f32[1,32], index: 9, kind: input, shape index: {}]
  %s10 = inlined_call_operand.vmem [shape: f32[32,32], index: 10, kind: input, shape index: {}]
  %s11 = inlined_call_operand.vmem [shape: f32[1,32], index: 11, kind: input, shape index: {}]
  %s12 = inlined_call_operand.vmem [shape: f32[1,32], index: 12, kind: input, shape index: {}]
  %s13 = inlined_call_operand.hbm [shape: f32[32,32], index: 13, kind: input, shape index: {}]
  %s14 = inlined_call_operand.hbm [shape: f32[16,32], index: 14, kind: output, shape index: {0}]
  %s15 = inlined_call_operand.hbm [shape: f32[16,32], index: 15, kind: output, shape index: {1}]
  %16 = xla_tuple %s14, %s15
  %s17 = sld [smem:[#allocation0]]
  $region110: #{tpu_custom_call.1} parent=0
    _
  %s19 = ssub.s32 1, %s17
  %s20 = scalar_select 0, %s19, %s17
  $region1: #{tpu_custom_call.1} parent=0
    #allocation2 [shape = 'u8[8192]{0}', space=vmem, size = 0x2000, scoped, tag = 'input window, operand 0, single buffered']
    #allocation3 [shape = 's32[1]{0}', space=sflag, size = 0x4, scoped, tag = 'scoped memory for tpu_custom_call.1']
    #allocation4 [shape = 's32[1]{0}', space=sflag, size = 0x4, scoped, tag = 'scoped memory for tpu_custom_call.1']
    #allocation5 [shape = 'u8[8192]{0}', space=vmem, size = 0x2000, scoped, tag = 'input window, operand 2, single buffered']
    #allocation6 [shape = 's32[1]{0}', space=sflag, size = 0x4, scoped, tag = 'scoped memory for tpu_custom_call.1']
    #allocation7 [shape = 'u8[4096]{0}', space=vmem, size = 0x1000, scoped, tag = 'input window, operand 4, single buffered']
    #allocation8 [shape = 'u8[512]{0}', space=vmem, size = 0x400, scoped, tag = 'input window, operand 5, single buffered']
    #allocation9 [shape = 's32[1]{0}', space=sflag, size = 0x4, scoped, tag = 'scoped memory for tpu_custom_call.1']
    #allocation10 [shape = 'u8[16384]{0}', space=vmem, size = 0x4000, scoped, tag = 'input window, operand 6, single buffered']
    #allocation11 [shape = 'u8[512]{0}', space=vmem, size = 0x400, scoped, tag = 'input window, operand 7, single buffered']
    #allocation12 [shape = 's32[1]{0}', space=sflag, size = 0x4, scoped, tag = 'scoped memory for tpu_custom_call.1']
    #allocation13 [shape = 'u8[512]{0}', space=vmem, size = 0x400, scoped, tag = 'input window, operand 8, single buffered']
    #allocation14 [shape = 'u8[512]{0}', space=vmem, size = 0x400, scoped, tag = 'input window, operand 9, single buffered']
    #allocation15 [shape = 's32[1]{0}', space=sflag, size = 0x4, scoped, tag = 'scoped memory for tpu_custom_call.1']
    #allocation16 [shape = 'u8[16384]{0}', space=vmem, size = 0x4000, scoped, tag = 'input window, operand 13, single buffered']
    #allocation17 [shape = 'u8[8192]{0}', space=vmem, size = 0x2000, scoped, tag = 'output window, operand 0, single buffered']
    #allocation18 [shape = 'u8[8192]{0}', space=vmem, size = 0x2000, scoped, tag = 'output window, operand 1, single buffered']
    #allocation19 [shape = 's32[1]{0}', space=sflag, size = 0x4, scoped, tag = 'scoped memory for tpu_custom_call.1']
    %21 = vsyncpa [#allocation3], 0
    %22 = vsyncpa [#allocation6], 0
    %23 = vsyncpa [#allocation9], 0
    %24 = vsyncpa [#allocation12], 0
    %25 = vsyncpa [#allocation15], 0
    %26 = vsyncpa [#allocation4], 0
    %27 = vsyncpa [#allocation19], 0
    // Predicated region
    $region2: #{tpu_custom_call.1} parent=1 // pred_check
      _
    $region3: #{tpu_custom_call.1} parent=1 // pred_check_branch
      %29 = sbr.rel (0) target = $region5
    $region4: #{tpu_custom_call.1} parent=1 // pred_region
      %31 = vsyncadd [#allocation3], 0
      %s32 = sshll.u32 %s0, 4
      %s33 = int_to_ptr.hbm [resolvable:$true] %s32
      %s34 = sshll.u32 [#allocation2], 4
      %s35 = int_to_ptr.vmem [resolvable:$true] %s34
      %40 = dma.hbm_to_vmem [thread:$0]  %s33, 256, %s35, [#allocation3], 128, 128, 8
    $region5: #{tpu_custom_call.1} parent=1 // pred_fallthru
      _
    // Predicated region
    $region6: #{tpu_custom_call.1} parent=1 // pred_check
      _
    $region7: #{tpu_custom_call.1} parent=1 // pred_check_branch
      %42 = sbr.rel (0) target = $region9
    $region8: #{tpu_custom_call.1} parent=1 // pred_region
      _
    $region9: #{tpu_custom_call.1} parent=1 // pred_fallthru
      _
    // Predicated region
    $region10: #{tpu_custom_call.1} parent=1 // pred_check
      _
    $region11: #{tpu_custom_call.1} parent=1 // pred_check_branch
      %44 = sbr.rel (0) target = $region13
    $region12: #{tpu_custom_call.1} parent=1 // pred_region
      %46 = vsyncadd [#allocation6], 0
      %s47 = sshll.u32 %s2, 4
      %s48 = int_to_ptr.hbm [resolvable:$true] %s47
      %s49 = sshll.u32 [#allocation5], 4
      %s50 = int_to_ptr.vmem [resolvable:$true] %s49
      %55 = dma.hbm_to_vmem [thread:$0]  %s48, 256, %s50, [#allocation6], 128, 128, 8
    $region13: #{tpu_custom_call.1} parent=1 // pred_fallthru
      _
    // Predicated region
    $region14: #{tpu_custom_call.1} parent=1 // pred_check
      _
    $region15: #{tpu_custom_call.1} parent=1 // pred_check_branch
      %57 = sbr.rel (0) target = $region17
    $region16: #{tpu_custom_call.1} parent=1 // pred_region
      _
    $region17: #{tpu_custom_call.1} parent=1 // pred_fallthru
      _
    // Predicated region
    $region18: #{tpu_custom_call.1} parent=1 // pred_check
      _
    $region19: #{tpu_custom_call.1} parent=1 // pred_check_branch
      %59 = sbr.rel (0) target = $region21
    $region20: #{tpu_custom_call.1} parent=1 // pred_region
      %61 = vsyncadd [#allocation6], 0
      %s63 = sshll.u32 %s4, 4
      %s64 = int_to_ptr.hbm [resolvable:$true] %s63
      %s65 = sshll.u32 [#allocation7], 4
      %s66 = int_to_ptr.vmem [resolvable:$true] %s65
      %68 = dma.hbm_to_vmem [thread:$0]  %s64, 128, %s66, [#allocation6]
    $region21: #{tpu_custom_call.1} parent=1 // pred_fallthru
      _
    // Predicated region
    $region22: #{tpu_custom_call.1} parent=1 // pred_check
      _
    $region23: #{tpu_custom_call.1} parent=1 // pred_check_branch
      %70 = sbr.rel (0) target = $region25
    $region24: #{tpu_custom_call.1} parent=1 // pred_region
      %72 = vsyncadd [#allocation9], 0
      %s74 = sshll.u32 %s5, 4
      %s75 = int_to_ptr.hbm [resolvable:$true] %s74
      %s76 = sshll.u32 [#allocation8], 4
      %s77 = int_to_ptr.vmem [resolvable:$true] %s76
      %79 = dma.hbm_to_vmem [thread:$0]  %s75, 16, %s77, [#allocation9]
    $region25: #{tpu_custom_call.1} parent=1 // pred_fallthru
      _
    // Predicated region
    $region26: #{tpu_custom_call.1} parent=1 // pred_check
      _
    $region27: #{tpu_custom_call.1} parent=1 // pred_check_branch
      %81 = sbr.rel (0) target = $region29
    $region28: #{tpu_custom_call.1} parent=1 // pred_region
      %83 = vsyncadd [#allocation9], 0
      %s84 = sshll.u32 %s6, 4
      %s85 = int_to_ptr.hbm [resolvable:$true] %s84
      %s86 = sshll.u32 [#allocation10], 4
      %s87 = int_to_ptr.vmem [resolvable:$true] %s86
      %92 = dma.hbm_to_vmem [thread:$0]  %s85, 512, %s87, [#allocation9], 128, 128, 8
    $region29: #{tpu_custom_call.1} parent=1 // pred_fallthru
      _
    // Predicated region
    $region30: #{tpu_custom_call.1} parent=1 // pred_check
      _
    $region31: #{tpu_custom_call.1} parent=1 // pred_check_branch
      %94 = sbr.rel (0) target = $region33
    $region32: #{tpu_custom_call.1} parent=1 // pred_region
      %96 = vsyncadd [#allocation12], 0
      %s98 = sshll.u32 %s7, 4
      %s99 = int_to_ptr.hbm [resolvable:$true] %s98
      %s100 = sshll.u32 [#allocation11], 4
      %s101 = int_to_ptr.vmem [resolvable:$true] %s100
      %103 = dma.hbm_to_vmem [thread:$0]  %s99, 16, %s101, [#allocation12]
    $region33: #{tpu_custom_call.1} parent=1 // pred_fallthru
      _
    // Predicated region
    $region34: #{tpu_custom_call.1} parent=1 // pred_check
      _
    $region35: #{tpu_custom_call.1} parent=1 // pred_check_branch
      %105 = sbr.rel (0) target = $region37
    $region36: #{tpu_custom_call.1} parent=1 // pred_region
      %107 = vsyncadd [#allocation12], 0
      %s109 = sshll.u32 %s8, 4
      %s110 = int_to_ptr.hbm [resolvable:$true] %s109
      %s111 = sshll.u32 [#allocation13], 4
      %s112 = int_to_ptr.vmem [resolvable:$true] %s111
      %114 = dma.hbm_to_vmem [thread:$0]  %s110, 16, %s112, [#allocation12]
    $region37: #{tpu_custom_call.1} parent=1 // pred_fallthru
      _
    // Predicated region
    $region38: #{tpu_custom_call.1} parent=1 // pred_check
      _
    $region39: #{tpu_custom_call.1} parent=1 // pred_check_branch
      %116 = sbr.rel (0) target = $region41
    $region40: #{tpu_custom_call.1} parent=1 // pred_region
      %118 = vsyncadd [#allocation15], 0
      %s120 = sshll.u32 %s9, 4
      %s121 = int_to_ptr.hbm [resolvable:$true] %s120
      %s122 = sshll.u32 [#allocation14], 4
      %s123 = int_to_ptr.vmem [resolvable:$true] %s122
      %125 = dma.hbm_to_vmem [thread:$0]  %s121, 16, %s123, [#allocation15]
    $region41: #{tpu_custom_call.1} parent=1 // pred_fallthru
      _
    // Predicated region
    $region42: #{tpu_custom_call.1} parent=1 // pred_check
      _
    $region43: #{tpu_custom_call.1} parent=1 // pred_check_branch
      %127 = sbr.rel (0) target = $region45
    $region44: #{tpu_custom_call.1} parent=1 // pred_region
      _
    $region45: #{tpu_custom_call.1} parent=1 // pred_fallthru
      _
    // Predicated region
    $region46: #{tpu_custom_call.1} parent=1 // pred_check
      _
    $region47: #{tpu_custom_call.1} parent=1 // pred_check_branch
      %129 = sbr.rel (0) target = $region49
    $region48: #{tpu_custom_call.1} parent=1 // pred_region
      _
    $region49: #{tpu_custom_call.1} parent=1 // pred_fallthru
      _
    // Predicated region
    $region50: #{tpu_custom_call.1} parent=1 // pred_check
      _
    $region51: #{tpu_custom_call.1} parent=1 // pred_check_branch
      %131 = sbr.rel (0) target = $region53
    $region52: #{tpu_custom_call.1} parent=1 // pred_region
      _
    $region53: #{tpu_custom_call.1} parent=1 // pred_fallthru
      _
    // Predicated region
    $region54: #{tpu_custom_call.1} parent=1 // pred_check
      _
    $region55: #{tpu_custom_call.1} parent=1 // pred_check_branch
      %133 = sbr.rel (0) target = $region57
    $region56: #{tpu_custom_call.1} parent=1 // pred_region
      %135 = vsyncadd [#allocation15], 0
      %s136 = sshll.u32 %s13, 4
      %s137 = int_to_ptr.hbm [resolvable:$true] %s136
      %s138 = sshll.u32 [#allocation16], 4
      %s139 = int_to_ptr.vmem [resolvable:$true] %s138
      %144 = dma.hbm_to_vmem [thread:$0]  %s137, 512, %s139, [#allocation15], 128, 128, 8
    $region57: #{tpu_custom_call.1} parent=1 // pred_fallthru
      _
    // Predicated region
    $region58: #{tpu_custom_call.1} parent=1 // pred_check
      _
    $region59: #{tpu_custom_call.1} parent=1 // pred_check_branch
      %146 = sbr.rel (0) target = $region61
    $region60: #{tpu_custom_call.1} parent=1 // pred_region
      %148 = dma.done [#allocation3], 256
    $region61: #{tpu_custom_call.1} parent=1 // pred_fallthru
      _
    // Predicated region
    $region62: #{tpu_custom_call.1} parent=1 // pred_check
      _
    $region63: #{tpu_custom_call.1} parent=1 // pred_check_branch
      %150 = sbr.rel (0) target = $region65
    $region64: #{tpu_custom_call.1} parent=1 // pred_region
      %152 = dma.done [#allocation6], 256
    $region65: #{tpu_custom_call.1} parent=1 // pred_fallthru
      _
    // Predicated region
    $region66: #{tpu_custom_call.1} parent=1 // pred_check
      _
    $region67: #{tpu_custom_call.1} parent=1 // pred_check_branch
      %154 = sbr.rel (0) target = $region69
    $region68: #{tpu_custom_call.1} parent=1 // pred_region
      %156 = dma.done [#allocation6], 128
    $region69: #{tpu_custom_call.1} parent=1 // pred_fallthru
      _
    // Predicated region
    $region70: #{tpu_custom_call.1} parent=1 // pred_check
      _
    $region71: #{tpu_custom_call.1} parent=1 // pred_check_branch
      %158 = sbr.rel (0) target = $region73
    $region72: #{tpu_custom_call.1} parent=1 // pred_region
      %160 = dma.done [#allocation9], 16
    $region73: #{tpu_custom_call.1} parent=1 // pred_fallthru
      _
    // Predicated region
    $region74: #{tpu_custom_call.1} parent=1 // pred_check
      _
    $region75: #{tpu_custom_call.1} parent=1 // pred_check_branch
      %162 = sbr.rel (0) target = $region77
    $region76: #{tpu_custom_call.1} parent=1 // pred_region
      %164 = dma.done [#allocation9], 512
    $region77: #{tpu_custom_call.1} parent=1 // pred_fallthru
      _
    // Predicated region
    $region78: #{tpu_custom_call.1} parent=1 // pred_check
      _
    $region79: #{tpu_custom_call.1} parent=1 // pred_check_branch
      %166 = sbr.rel (0) target = $region81
    $region80: #{tpu_custom_call.1} parent=1 // pred_region
      %168 = dma.done [#allocation12], 16
    $region81: #{tpu_custom_call.1} parent=1 // pred_fallthru
      _
    // Predicated region
    $region82: #{tpu_custom_call.1} parent=1 // pred_check
      _
    $region83: #{tpu_custom_call.1} parent=1 // pred_check_branch
      %170 = sbr.rel (0) target = $region85
    $region84: #{tpu_custom_call.1} parent=1 // pred_region
      %172 = dma.done [#allocation12], 16
    $region85: #{tpu_custom_call.1} parent=1 // pred_fallthru
      _
    // Predicated region
    $region86: #{tpu_custom_call.1} parent=1 // pred_check
      _
    $region87: #{tpu_custom_call.1} parent=1 // pred_check_branch
      %174 = sbr.rel (0) target = $region89
    $region88: #{tpu_custom_call.1} parent=1 // pred_region
      %176 = dma.done [#allocation15], 16
    $region89: #{tpu_custom_call.1} parent=1 // pred_fallthru
      _
    // Predicated region
    $region90: #{tpu_custom_call.1} parent=1 // pred_check
      _
    $region91: #{tpu_custom_call.1} parent=1 // pred_check_branch
      %178 = sbr.rel (0) target = $region93
    $region92: #{tpu_custom_call.1} parent=1 // pred_region
      %180 = dma.done [#allocation15], 512
    $region93: #{tpu_custom_call.1} parent=1 // pred_fallthru
      _
    %v181 = vld [vmem:[#allocation2] sm:$0xff]
    %v182 = vld [vmem:[#allocation2 + $0x8] sm:$0xff]
    %v183 = vld [vmem:[#allocation5] sm:$0xff]
    %v184 = vld [vmem:[#allocation5 + $0x8] sm:$0xff]
    %v185 = vld [vmem:[%s3] sm:$0x1]
    %v187 = vperm.slane %v185, 0
    %vm189 = vcmask 130048
    %v191 = vsel %vm189, %v181, 0
    %v194 = vsel %vm189, %v182, 0
    %196 = vmatpush.msra.mxu0 0.0
    %197 = vmatpush.msra.mxu0 0.0
    %198 = vmatpush.msra.mxu0 0.0
    %199 = vmatpush.msra.mxu0 0.0
    %200 = vmatpush.msra.mxu0 0.0
    %201 = vmatpush.msra.mxu0 0.0
    %202 = vmatpush.msra.mxu0 0.0
    %203 = vmatpush.msra.mxu0 0.0
    %204 = vmatpush.msra.mxu0 0.0
    %205 = vmatpush.msra.mxu0 0.0
    %206 = vmatpush.msra.mxu0 0.0
    %207 = vmatpush.msra.mxu0 0.0
    %208 = vmatpush.msra.mxu0 0.0
    %209 = vmatpush.msra.mxu0 0.0
    %210 = vmatpush.msra.mxu0 %v184
    %211 = vmatpush.msra.mxu0 %v183
    %212 = vmatmul.f32.gmra.mxu0 %v191
    %v213 = vpop.f32.mrf.mxu0
    %v214 = vadd.f32 %v187, %v213
    %215 = vmatmul.f32.gmra.mxu0 %v194
    %v216 = vpop.f32.mrf.mxu0
    %v217 = vadd.f32 %v187, %v216
    %218 = vdwg.mxu0
    %v219 = vld [vmem:[%s1] sm:$0xff]
    %v220 = vld [vmem:[%s1 + $0x8] sm:$0xff]
    %v221 = vld [vmem:[#allocation7] sm:$0xff]
    %v222 = vld [vmem:[#allocation8] sm:$0x1]
    %v224 = vperm.slane %v222, 0
    %vm226 = vcmask 64512
    %v228 = vsel %vm226, %v219, 0
    %v231 = vsel %vm226, %v220, 0
    %233 = vmatpush.msra.mxu0 0.0
    %234 = vmatpush.msra.mxu0 0.0
    %235 = vmatpush.msra.mxu0 0.0
    %236 = vmatpush.msra.mxu0 0.0
    %237 = vmatpush.msra.mxu0 0.0
    %238 = vmatpush.msra.mxu0 0.0
    %239 = vmatpush.msra.mxu0 0.0
    %240 = vmatpush.msra.mxu0 0.0
    %241 = vmatpush.msra.mxu0 0.0
    %242 = vmatpush.msra.mxu0 0.0
    %243 = vmatpush.msra.mxu0 0.0
    %244 = vmatpush.msra.mxu0 0.0
    %245 = vmatpush.msra.mxu0 0.0
    %246 = vmatpush.msra.mxu0 0.0
    %247 = vmatpush.msra.mxu0 0.0
    %248 = vmatpush.msra.mxu0 %v221
    %249 = vmatmul.f32.gmra.mxu0 %v228
    %v250 = vpop.f32.mrf.mxu0
    %v251 = vadd.f32 %v224, %v250
    %252 = vmatmul.f32.gmra.mxu0 %v231
    %v253 = vpop.f32.mrf.mxu0
    %v254 = vadd.f32 %v224, %v253
    %255 = vdwg.mxu0
    %vm256 = vcmask 261120
    %v257 = vsel %vm256, %v214, 0.0
    %258 = vadd.xlane.f32.xlu0 %v257
    %v259 = vpop.xlane.xlu0 %258
    %v260 = vsel %vm256, %v217, 0.0
    %261 = vadd.xlane.f32.xlu0 %v260
    %v262 = vpop.xlane.xlu0 %261
    %v263 = vsel %vm256, %v251, 0.0
    %264 = vadd.xlane.f32.xlu0 %v263
    %v265 = vpop.xlane.xlu0 %264
    %v266 = vsel %vm256, %v254, 0.0
    %267 = vadd.xlane.f32.xlu0 %v266
    %v268 = vpop.xlane.xlu0 %267
    %v269 = vrcp.pop 32.0
    %v270 = vmul.f32 32.0, %v269
    %v271 = vsub.f32 1.0, %v270
    %v272 = vmul.f32 %v269, %v271
    %v273 = vadd.f32 %v269, %v272
    %vm274 = vweird.f32 %v269
    %v275 = vsel %vm274, %v269, %v273
    %v276 = vmul.f32 %v259, %v275
    %v277 = vmul.f32 %v262, %v275
    %v278 = vmul.f32 %v265, %v275
    %v279 = vmul.f32 %v268, %v275
    %v280 = vsub.f32 %v214, %v276
    %v281 = vsub.f32 %v217, %v277
    %v282 = vsub.f32 %v251, %v278
    %v283 = vsub.f32 %v254, %v279
    %v284 = vmul.f32 %v280, %v280
    %v285 = vmul.f32 %v281, %v281
    %v286 = vmul.f32 %v282, %v282
    %v287 = vmul.f32 %v283, %v283
    %v288 = vsel %vm256, %v284, 0.0
    %289 = vadd.xlane.f32.xlu0 %v288
    %v290 = vpop.xlane.xlu0 %289
    %v291 = vsel %vm256, %v285, 0.0
    %292 = vadd.xlane.f32.xlu0 %v291
    %v293 = vpop.xlane.xlu0 %292
    %v294 = vsel %vm256, %v286, 0.0
    %295 = vadd.xlane.f32.xlu0 %v294
    %v296 = vpop.xlane.xlu0 %295
    %v297 = vsel %vm256, %v287, 0.0
    %298 = vadd.xlane.f32.xlu0 %v297
    %v299 = vpop.xlane.xlu0 %298
    %v300 = vmul.f32 %v290, %v275
    %v301 = vmul.f32 %v293, %v275
    %v302 = vmul.f32 %v296, %v275
    %v303 = vmul.f32 %v299, %v275
    %v304 = vadd.f32 %v300, 1e-05
    %v305 = vadd.f32 %v301, 1e-05
    %v306 = vadd.f32 %v302, 1e-05
    %v307 = vadd.f32 %v303, 1e-05
    %v308 = vrsqrt.pop %v304
    %v309 = vmul.f32 %v308, %v304
    %v310 = vmul.f32 %v309, %v308
    %v311 = vmul.f32 0.5, %v310
    %v312 = vsub.f32 1.5, %v311
    %v313 = vmul.f32 %v308, %v312
    %vm314 = vweird.f32 %v304
    %vm315 = vweird.f32 %v308
    %vm316 = vmor %vm314, %vm315
    %v317 = vsel %vm316, %v308, %v313
    %v318 = vrsqrt.pop %v305
    %v319 = vmul.f32 %v318, %v305
    %v320 = vmul.f32 %v319, %v318
    %v321 = vmul.f32 0.5, %v320
    %v322 = vsub.f32 1.5, %v321
    %v323 = vmul.f32 %v318, %v322
    %vm324 = vweird.f32 %v305
    %vm325 = vweird.f32 %v318
    %vm326 = vmor %vm324, %vm325
    %v327 = vsel %vm326, %v318, %v323
    %v328 = vrsqrt.pop %v306
    %v329 = vmul.f32 %v328, %v306
    %v330 = vmul.f32 %v329, %v328
    %v331 = vmul.f32 0.5, %v330
    %v332 = vsub.f32 1.5, %v331
    %v333 = vmul.f32 %v328, %v332
    %vm334 = vweird.f32 %v306
    %vm335 = vweird.f32 %v328
    %vm336 = vmor %vm334, %vm335
    %v337 = vsel %vm336, %v328, %v333
    %v338 = vrsqrt.pop %v307
    %v339 = vmul.f32 %v338, %v307
    %v340 = vmul.f32 %v339, %v338
    %v341 = vmul.f32 0.5, %v340
    %v342 = vsub.f32 1.5, %v341
    %v343 = vmul.f32 %v338, %v342
    %vm344 = vweird.f32 %v307
    %vm345 = vweird.f32 %v338
    %vm346 = vmor %vm344, %vm345
    %v347 = vsel %vm346, %v338, %v343
    %v348 = vmul.f32 %v280, %v317
    %v349 = vmul.f32 %v281, %v327
    %v350 = vmul.f32 %v282, %v337
    %v351 = vmul.f32 %v283, %v347
    %v352 = vld [vmem:[#allocation13] sm:$0x1]
    %v354 = vperm.slane %v352, 0
    %v356 = vmul.f32 %v348, %v354
    %v357 = vmul.f32 %v349, %v354
    %v358 = vmul.f32 %v350, %v354
    %v359 = vmul.f32 %v351, %v354
    %v360 = vld [vmem:[#allocation14] sm:$0x1]
    %v362 = vperm.slane %v360, 0
    %v364 = vadd.f32 %v356, %v362
    %v365 = vadd.f32 %v357, %v362
    %v366 = vadd.f32 %v358, %v362
    %v367 = vadd.f32 %v359, %v362
    %v368 = vld [vmem:[#allocation10] sm:$0xff]
    %v369 = vld [vmem:[#allocation10 + $0x8] sm:$0xff]
    %v370 = vld [vmem:[#allocation10 + $0x10] sm:$0xff]
    %v371 = vld [vmem:[#allocation10 + $0x18] sm:$0xff]
    %v372 = vld [vmem:[#allocation11] sm:$0x1]
    %v374 = vperm.slane %v372, 0
    %v377 = vsel %vm256, %v348, 0
    %v380 = vsel %vm256, %v349, 0
    %v383 = vsel %vm256, %v350, 0
    %v386 = vsel %vm256, %v351, 0
    %388 = vmatpush.msra.mxu0 0.0
    %389 = vmatpush.msra.mxu0 0.0
    %390 = vmatpush.msra.mxu0 0.0
    %391 = vmatpush.msra.mxu0 0.0
    %392 = vmatpush.msra.mxu0 0.0
    %393 = vmatpush.msra.mxu0 0.0
    %394 = vmatpush.msra.mxu0 0.0
    %395 = vmatpush.msra.mxu0 0.0
    %396 = vmatpush.msra.mxu0 0.0
    %397 = vmatpush.msra.mxu0 0.0
    %398 = vmatpush.msra.mxu0 0.0
    %399 = vmatpush.msra.mxu0 0.0
    %400 = vmatpush.msra.mxu0 %v371
    %401 = vmatpush.msra.mxu0 %v370
    %402 = vmatpush.msra.mxu0 %v369
    %403 = vmatpush.msra.mxu0 %v368
    %404 = vmatmul.f32.gmra.mxu0 %v377
    %v405 = vpop.f32.mrf.mxu0
    %v406 = vadd.f32 %v374, %v405
    %407 = vmatmul.f32.gmra.mxu0 %v380
    %v408 = vpop.f32.mrf.mxu0
    %v409 = vadd.f32 %v374, %v408
    %410 = vmatmul.f32.gmra.mxu0 %v383
    %v411 = vpop.f32.mrf.mxu0
    %v412 = vadd.f32 %v374, %v411
    %413 = vmatmul.f32.gmra.mxu0 %v386
    %v414 = vpop.f32.mrf.mxu0
    %v415 = vadd.f32 %v374, %v414
    %416 = vdwg.mxu0
    %v417 = vld [vmem:[%s10] sm:$0xff]
    %v418 = vld [vmem:[%s10 + $0x8] sm:$0xff]
    %v419 = vld [vmem:[%s10 + $0x10] sm:$0xff]
    %v420 = vld [vmem:[%s10 + $0x18] sm:$0xff]
    %v421 = vld [vmem:[#allocation16] sm:$0xff]
    %v422 = vld [vmem:[#allocation16 + $0x8] sm:$0xff]
    %v423 = vld [vmem:[#allocation16 + $0x10] sm:$0xff]
    %v424 = vld [vmem:[#allocation16 + $0x18] sm:$0xff]
    %429 = vrot.lane.b32.xlu0 %v406, 96
    %v430 = vpop.permute.xlu0 %429
    %431 = vrot.lane.b32.xlu0 %v409, 96
    %v432 = vpop.permute.xlu0 %431
    %433 = vrot.lane.b32.xlu0 %v412, 96
    %v434 = vpop.permute.xlu0 %433
    %435 = vrot.lane.b32.xlu0 %v415, 96
    %v436 = vpop.permute.xlu0 %435
    %v437 = vsel %vm226, %v406, 0
    %v439 = vsel %vm226, %v409, 0
    %v441 = vsel %vm226, %v412, 0
    %v443 = vsel %vm226, %v415, 0
    %v445 = vsel %vm226, %v430, 0
    %v447 = vsel %vm226, %v432, 0
    %v449 = vsel %vm226, %v434, 0
    %v451 = vsel %vm226, %v436, 0
    %453 = vmatpush.xpose.msra.mxu0 0.0
    %454 = vmatpush.xpose.msra.mxu0 0.0
    %455 = vmatpush.xpose.msra.mxu0 0.0
    %456 = vmatpush.xpose.msra.mxu0 0.0
    %457 = vmatpush.xpose.msra.mxu0 0.0
    %458 = vmatpush.xpose.msra.mxu0 0.0
    %459 = vmatpush.xpose.msra.mxu0 0.0
    %460 = vmatpush.xpose.msra.mxu0 0.0
    %461 = vmatpush.xpose.msra.mxu0 0.0
    %462 = vmatpush.xpose.msra.mxu0 0.0
    %463 = vmatpush.xpose.msra.mxu0 0.0
    %464 = vmatpush.xpose.msra.mxu0 0.0
    %465 = vmatpush.xpose.msra.mxu0 %v451
    %466 = vmatpush.xpose.msra.mxu0 %v449
    %467 = vmatpush.xpose.msra.mxu0 %v447
    %468 = vmatpush.xpose.msra.mxu0 %v445
    %469 = vmatmul.f32.gmra.mxu0 %v437
    %v470 = vpop.f32.mrf.mxu0
    %v471 = vadd.f32 %v421, %v470
    %472 = vmatmul.f32.gmra.mxu0 %v439
    %v473 = vpop.f32.mrf.mxu0
    %v474 = vadd.f32 %v422, %v473
    %475 = vmatmul.f32.gmra.mxu0 %v441
    %v476 = vpop.f32.mrf.mxu0
    %v477 = vadd.f32 %v423, %v476
    %478 = vmatmul.f32.gmra.mxu0 %v443
    %v479 = vpop.f32.mrf.mxu0
    %v480 = vadd.f32 %v424, %v479
    %481 = vdwg.mxu0
    %v482 = vsel %vm256, %v471, -inf
    %483 = vmax.xlane.f32.xlu0 %v482
    %v484 = vpop.xlane.xlu0 %483
    %v485 = vsel %vm256, %v474, -inf
    %486 = vmax.xlane.f32.xlu0 %v485
    %v487 = vpop.xlane.xlu0 %486
    %v488 = vsel %vm256, %v477, -inf
    %489 = vmax.xlane.f32.xlu0 %v488
    %v490 = vpop.xlane.xlu0 %489
    %v491 = vsel %vm256, %v480, -inf
    %492 = vmax.xlane.f32.xlu0 %v491
    %v493 = vpop.xlane.xlu0 %492
    %v494 = vsub.f32 %v471, %v484
    %v495 = vsub.f32 %v474, %v487
    %v496 = vsub.f32 %v477, %v490
    %v497 = vsub.f32 %v480, %v493
    %v498 = vmul.f32 %v494, 1.442695
    %v499 = vpow.pop %v498
    %v500 = vmul.f32 %v495, 1.442695
    %v501 = vpow.pop %v500
    %v502 = vmul.f32 %v496, 1.442695
    %v503 = vpow.pop %v502
    %v504 = vmul.f32 %v497, 1.442695
    %v505 = vpow.pop %v504
    %v506 = vsel %vm256, %v499, 0.0
    %507 = vadd.xlane.f32.xlu0 %v506
    %v508 = vpop.xlane.xlu0 %507
    %v509 = vsel %vm256, %v501, 0.0
    %510 = vadd.xlane.f32.xlu0 %v509
    %v511 = vpop.xlane.xlu0 %510
    %v512 = vsel %vm256, %v503, 0.0
    %513 = vadd.xlane.f32.xlu0 %v512
    %v514 = vpop.xlane.xlu0 %513
    %v515 = vsel %vm256, %v505, 0.0
    %516 = vadd.xlane.f32.xlu0 %v515
    %v517 = vpop.xlane.xlu0 %516
    %v518 = vrcp.pop %v508
    %v519 = vrcp.pop %v511
    %v520 = vrcp.pop %v514
    %v521 = vrcp.pop %v517
    %v522 = vmul.f32 %v508, %v518
    %v523 = vmul.f32 %v511, %v519
    %v524 = vmul.f32 %v514, %v520
    %v525 = vmul.f32 %v517, %v521
    %v526 = vsub.f32 2.0, %v522
    %v527 = vsub.f32 2.0, %v523
    %v528 = vsub.f32 2.0, %v524
    %v529 = vsub.f32 2.0, %v525
    %v530 = vmul.f32 %v518, %v526
    %v531 = vmul.f32 %v519, %v527
    %v532 = vmul.f32 %v520, %v528
    %v533 = vmul.f32 %v521, %v529
    %v534 = vmul.f32 %v499, %v530
    %v535 = vmul.f32 %v501, %v531
    %v536 = vmul.f32 %v503, %v532
    %v537 = vmul.f32 %v505, %v533
    %538 = vrot.lane.b32.xlu0 %v406, 64
    %v539 = vpop.permute.xlu0 %538
    %540 = vrot.lane.b32.xlu0 %v409, 64
    %v541 = vpop.permute.xlu0 %540
    %542 = vrot.lane.b32.xlu0 %v412, 64
    %v543 = vpop.permute.xlu0 %542
    %544 = vrot.lane.b32.xlu0 %v415, 64
    %v545 = vpop.permute.xlu0 %544
    %v551 = vsel %vm256, %v534, 0
    %v554 = vsel %vm256, %v535, 0
    %v557 = vsel %vm256, %v536, 0
    %v560 = vsel %vm256, %v537, 0
    %562 = vmatpush.msra.mxu0 0.0
    %563 = vmatpush.msra.mxu0 0.0
    %564 = vmatpush.msra.mxu0 0.0
    %565 = vmatpush.msra.mxu0 0.0
    %566 = vmatpush.msra.mxu0 0.0
    %567 = vmatpush.msra.mxu0 0.0
    %568 = vmatpush.msra.mxu0 0.0
    %569 = vmatpush.msra.mxu0 0.0
    %570 = vmatpush.msra.mxu0 0.0
    %571 = vmatpush.msra.mxu0 0.0
    %572 = vmatpush.msra.mxu0 0.0
    %573 = vmatpush.msra.mxu0 0.0
    %574 = vmatpush.msra.mxu0 %v545
    %575 = vmatpush.msra.mxu0 %v543
    %576 = vmatpush.msra.mxu0 %v541
    %577 = vmatpush.msra.mxu0 %v539
    %578 = vmatmul.f32.gmra.mxu0 %v551
    %v579 = vpop.f32.mrf.mxu0
    %v580 = vadd.f32 0.0, %v579
    %581 = vmatmul.f32.gmra.mxu0 %v554
    %v582 = vpop.f32.mrf.mxu0
    %v583 = vadd.f32 0.0, %v582
    %584 = vmatmul.f32.gmra.mxu0 %v557
    %v585 = vpop.f32.mrf.mxu0
    %v586 = vadd.f32 0.0, %v585
    %587 = vmatmul.f32.gmra.mxu0 %v560
    %v588 = vpop.f32.mrf.mxu0
    %v589 = vadd.f32 0.0, %v588
    %590 = vdwg.mxu0
    %591 = vrot.lane.b32.xlu0 %v406, 120
    %v592 = vpop.permute.xlu0 %591
    %593 = vrot.lane.b32.xlu0 %v409, 120
    %v594 = vpop.permute.xlu0 %593
    %595 = vrot.lane.b32.xlu0 %v412, 120
    %v596 = vpop.permute.xlu0 %595
    %597 = vrot.lane.b32.xlu0 %v415, 120
    %v598 = vpop.permute.xlu0 %597
    %599 = vrot.lane.b32.xlu0 %v406, 88
    %v600 = vpop.permute.xlu0 %599
    %601 = vrot.lane.b32.xlu0 %v409, 88
    %v602 = vpop.permute.xlu0 %601
    %603 = vrot.lane.b32.xlu0 %v412, 88
    %v604 = vpop.permute.xlu0 %603
    %605 = vrot.lane.b32.xlu0 %v415, 88
    %v606 = vpop.permute.xlu0 %605
    %v607 = vsel %vm226, %v592, 0
    %v609 = vsel %vm226, %v594, 0
    %v611 = vsel %vm226, %v596, 0
    %v613 = vsel %vm226, %v598, 0
    %v615 = vsel %vm226, %v600, 0
    %v617 = vsel %vm226, %v602, 0
    %v619 = vsel %vm226, %v604, 0
    %v621 = vsel %vm226, %v606, 0
    %623 = vmatpush.xpose.msra.mxu0 0.0
    %624 = vmatpush.xpose.msra.mxu0 0.0
    %625 = vmatpush.xpose.msra.mxu0 0.0
    %626 = vmatpush.xpose.msra.mxu0 0.0
    %627 = vmatpush.xpose.msra.mxu0 0.0
    %628 = vmatpush.xpose.msra.mxu0 0.0
    %629 = vmatpush.xpose.msra.mxu0 0.0
    %630 = vmatpush.xpose.msra.mxu0 0.0
    %631 = vmatpush.xpose.msra.mxu0 0.0
    %632 = vmatpush.xpose.msra.mxu0 0.0
    %633 = vmatpush.xpose.msra.mxu0 0.0
    %634 = vmatpush.xpose.msra.mxu0 0.0
    %635 = vmatpush.xpose.msra.mxu0 %v621
    %636 = vmatpush.xpose.msra.mxu0 %v619
    %637 = vmatpush.xpose.msra.mxu0 %v617
    %638 = vmatpush.xpose.msra.mxu0 %v615
    %639 = vmatmul.f32.gmra.mxu0 %v607
    %v640 = vpop.f32.mrf.mxu0
    %v641 = vadd.f32 %v421, %v640
    %642 = vmatmul.f32.gmra.mxu0 %v609
    %v643 = vpop.f32.mrf.mxu0
    %v644 = vadd.f32 %v422, %v643
    %645 = vmatmul.f32.gmra.mxu0 %v611
    %v646 = vpop.f32.mrf.mxu0
    %v647 = vadd.f32 %v423, %v646
    %648 = vmatmul.f32.gmra.mxu0 %v613
    %v649 = vpop.f32.mrf.mxu0
    %v650 = vadd.f32 %v424, %v649
    %651 = vdwg.mxu0
    %v652 = vsel %vm256, %v641, -inf
    %653 = vmax.xlane.f32.xlu0 %v652
    %v654 = vpop.xlane.xlu0 %653
    %v655 = vsel %vm256, %v644, -inf
    %656 = vmax.xlane.f32.xlu0 %v655
    %v657 = vpop.xlane.xlu0 %656
    %v658 = vsel %vm256, %v647, -inf
    %659 = vmax.xlane.f32.xlu0 %v658
    %v660 = vpop.xlane.xlu0 %659
    %v661 = vsel %vm256, %v650, -inf
    %662 = vmax.xlane.f32.xlu0 %v661
    %v663 = vpop.xlane.xlu0 %662
    %v664 = vsub.f32 %v641, %v654
    %v665 = vsub.f32 %v644, %v657
    %v666 = vsub.f32 %v647, %v660
    %v667 = vsub.f32 %v650, %v663
    %v668 = vmul.f32 %v664, 1.442695
    %v669 = vpow.pop %v668
    %v670 = vmul.f32 %v665, 1.442695
    %v671 = vpow.pop %v670
    %v672 = vmul.f32 %v666, 1.442695
    %v673 = vpow.pop %v672
    %v674 = vmul.f32 %v667, 1.442695
    %v675 = vpow.pop %v674
    %v676 = vsel %vm256, %v669, 0.0
    %677 = vadd.xlane.f32.xlu0 %v676
    %v678 = vpop.xlane.xlu0 %677
    %v679 = vsel %vm256, %v671, 0.0
    %680 = vadd.xlane.f32.xlu0 %v679
    %v681 = vpop.xlane.xlu0 %680
    %v682 = vsel %vm256, %v673, 0.0
    %683 = vadd.xlane.f32.xlu0 %v682
    %v684 = vpop.xlane.xlu0 %683
    %v685 = vsel %vm256, %v675, 0.0
    %686 = vadd.xlane.f32.xlu0 %v685
    %v687 = vpop.xlane.xlu0 %686
    %v688 = vrcp.pop %v678
    %v689 = vrcp.pop %v681
    %v690 = vrcp.pop %v684
    %v691 = vrcp.pop %v687
    %v692 = vmul.f32 %v678, %v688
    %v693 = vmul.f32 %v681, %v689
    %v694 = vmul.f32 %v684, %v690
    %v695 = vmul.f32 %v687, %v691
    %v696 = vsub.f32 2.0, %v692
    %v697 = vsub.f32 2.0, %v693
    %v698 = vsub.f32 2.0, %v694
    %v699 = vsub.f32 2.0, %v695
    %v700 = vmul.f32 %v688, %v696
    %v701 = vmul.f32 %v689, %v697
    %v702 = vmul.f32 %v690, %v698
    %v703 = vmul.f32 %v691, %v699
    %v704 = vmul.f32 %v669, %v700
    %v705 = vmul.f32 %v671, %v701
    %v706 = vmul.f32 %v673, %v702
    %v707 = vmul.f32 %v675, %v703
    %708 = vrot.lane.b32.xlu0 %v406, 56
    %v709 = vpop.permute.xlu0 %708
    %710 = vrot.lane.b32.xlu0 %v409, 56
    %v711 = vpop.permute.xlu0 %710
    %712 = vrot.lane.b32.xlu0 %v412, 56
    %v713 = vpop.permute.xlu0 %712
    %714 = vrot.lane.b32.xlu0 %v415, 56
    %v715 = vpop.permute.xlu0 %714
    %v721 = vsel %vm256, %v704, 0
    %v724 = vsel %vm256, %v705, 0
    %v727 = vsel %vm256, %v706, 0
    %v730 = vsel %vm256, %v707, 0
    %732 = vmatpush.msra.mxu0 0.0
    %733 = vmatpush.msra.mxu0 0.0
    %734 = vmatpush.msra.mxu0 0.0
    %735 = vmatpush.msra.mxu0 0.0
    %736 = vmatpush.msra.mxu0 0.0
    %737 = vmatpush.msra.mxu0 0.0
    %738 = vmatpush.msra.mxu0 0.0
    %739 = vmatpush.msra.mxu0 0.0
    %740 = vmatpush.msra.mxu0 0.0
    %741 = vmatpush.msra.mxu0 0.0
    %742 = vmatpush.msra.mxu0 0.0
    %743 = vmatpush.msra.mxu0 0.0
    %744 = vmatpush.msra.mxu0 %v715
    %745 = vmatpush.msra.mxu0 %v713
    %746 = vmatpush.msra.mxu0 %v711
    %747 = vmatpush.msra.mxu0 %v709
    %748 = vmatmul.f32.gmra.mxu0 %v721
    %v749 = vpop.f32.mrf.mxu0
    %v750 = vadd.f32 0.0, %v749
    %751 = vmatmul.f32.gmra.mxu0 %v724
    %v752 = vpop.f32.mrf.mxu0
    %v753 = vadd.f32 0.0, %v752
    %754 = vmatmul.f32.gmra.mxu0 %v727
    %v755 = vpop.f32.mrf.mxu0
    %v756 = vadd.f32 0.0, %v755
    %757 = vmatmul.f32.gmra.mxu0 %v730
    %v758 = vpop.f32.mrf.mxu0
    %v759 = vadd.f32 0.0, %v758
    %760 = vdwg.mxu0
    %v762 = vsel %vm226, %v750, 0
    %v765 = vsel %vm226, %v753, 0
    %v768 = vsel %vm226, %v756, 0
    %v771 = vsel %vm226, %v759, 0
    %773 = vmatpush.msra.mxu0 0.0
    %774 = vmatpush.msra.mxu0 0.0
    %775 = vmatpush.msra.mxu0 0.0
    %776 = vmatpush.msra.mxu0 0.0
    %777 = vmatpush.msra.mxu0 0.0
    %778 = vmatpush.msra.mxu0 0.0
    %779 = vmatpush.msra.mxu0 0.0
    %780 = vmatpush.msra.mxu0 0.0
    %781 = vmatpush.msra.mxu0 0.0
    %782 = vmatpush.msra.mxu0 0.0
    %783 = vmatpush.msra.mxu0 0.0
    %784 = vmatpush.msra.mxu0 0.0
    %785 = vmatpush.msra.mxu0 0.0
    %786 = vmatpush.msra.mxu0 0.0
    %787 = vmatpush.msra.mxu0 0.0
    %788 = vmatpush.msra.mxu0 %v418
    %789 = vmatmul.f32.gmra.mxu0 %v762
    %v790 = vpop.f32.mrf.mxu0
    %v791 = vadd.f32 0.0, %v790
    %792 = vmatmul.f32.gmra.mxu0 %v765
    %v793 = vpop.f32.mrf.mxu0
    %v794 = vadd.f32 0.0, %v793
    %795 = vmatmul.f32.gmra.mxu0 %v768
    %v796 = vpop.f32.mrf.mxu0
    %v797 = vadd.f32 0.0, %v796
    %798 = vmatmul.f32.gmra.mxu0 %v771
    %v799 = vpop.f32.mrf.mxu0
    %v800 = vadd.f32 0.0, %v799
    %801 = vdwg.mxu0
    %v803 = vsel %vm226, %v580, 0
    %v806 = vsel %vm226, %v583, 0
    %v809 = vsel %vm226, %v586, 0
    %v812 = vsel %vm226, %v589, 0
    %814 = vmatpush.msra.mxu0 0.0
    %815 = vmatpush.msra.mxu0 0.0
    %816 = vmatpush.msra.mxu0 0.0
    %817 = vmatpush.msra.mxu0 0.0
    %818 = vmatpush.msra.mxu0 0.0
    %819 = vmatpush.msra.mxu0 0.0
    %820 = vmatpush.msra.mxu0 0.0
    %821 = vmatpush.msra.mxu0 0.0
    %822 = vmatpush.msra.mxu0 0.0
    %823 = vmatpush.msra.mxu0 0.0
    %824 = vmatpush.msra.mxu0 0.0
    %825 = vmatpush.msra.mxu0 0.0
    %826 = vmatpush.msra.mxu0 0.0
    %827 = vmatpush.msra.mxu0 0.0
    %828 = vmatpush.msra.mxu0 0.0
    %829 = vmatpush.msra.mxu0 %v417
    %830 = vmatmul.f32.gmra.mxu0 %v803
    %v831 = vpop.f32.mrf.mxu0
    %v832 = vadd.f32 %v791, %v831
    %833 = vmatmul.f32.gmra.mxu0 %v806
    %v834 = vpop.f32.mrf.mxu0
    %v835 = vadd.f32 %v794, %v834
    %836 = vmatmul.f32.gmra.mxu0 %v809
    %v837 = vpop.f32.mrf.mxu0
    %v838 = vadd.f32 %v797, %v837
    %839 = vmatmul.f32.gmra.mxu0 %v812
    %v840 = vpop.f32.mrf.mxu0
    %v841 = vadd.f32 %v800, %v840
    %842 = vdwg.mxu0
    %843 = vrot.lane.b32.xlu0 %v406, 112
    %v844 = vpop.permute.xlu0 %843
    %845 = vrot.lane.b32.xlu0 %v409, 112
    %v846 = vpop.permute.xlu0 %845
    %847 = vrot.lane.b32.xlu0 %v412, 112
    %v848 = vpop.permute.xlu0 %847
    %849 = vrot.lane.b32.xlu0 %v415, 112
    %v850 = vpop.permute.xlu0 %849
    %851 = vrot.lane.b32.xlu0 %v406, 80
    %v852 = vpop.permute.xlu0 %851
    %853 = vrot.lane.b32.xlu0 %v409, 80
    %v854 = vpop.permute.xlu0 %853
    %855 = vrot.lane.b32.xlu0 %v412, 80
    %v856 = vpop.permute.xlu0 %855
    %857 = vrot.lane.b32.xlu0 %v415, 80
    %v858 = vpop.permute.xlu0 %857
    %v859 = vsel %vm226, %v844, 0
    %v861 = vsel %vm226, %v846, 0
    %v863 = vsel %vm226, %v848, 0
    %v865 = vsel %vm226, %v850, 0
    %v867 = vsel %vm226, %v852, 0
    %v869 = vsel %vm226, %v854, 0
    %v871 = vsel %vm226, %v856, 0
    %v873 = vsel %vm226, %v858, 0
    %875 = vmatpush.xpose.msra.mxu0 0.0
    %876 = vmatpush.xpose.msra.mxu0 0.0
    %877 = vmatpush.xpose.msra.mxu0 0.0
    %878 = vmatpush.xpose.msra.mxu0 0.0
    %879 = vmatpush.xpose.msra.mxu0 0.0
    %880 = vmatpush.xpose.msra.mxu0 0.0
    %881 = vmatpush.xpose.msra.mxu0 0.0
    %882 = vmatpush.xpose.msra.mxu0 0.0
    %883 = vmatpush.xpose.msra.mxu0 0.0
    %884 = vmatpush.xpose.msra.mxu0 0.0
    %885 = vmatpush.xpose.msra.mxu0 0.0
    %886 = vmatpush.xpose.msra.mxu0 0.0
    %887 = vmatpush.xpose.msra.mxu0 %v873
    %888 = vmatpush.xpose.msra.mxu0 %v871
    %889 = vmatpush.xpose.msra.mxu0 %v869
    %890 = vmatpush.xpose.msra.mxu0 %v867
    %891 = vmatmul.f32.gmra.mxu0 %v859
    %v892 = vpop.f32.mrf.mxu0
    %v893 = vadd.f32 %v421, %v892
    %894 = vmatmul.f32.gmra.mxu0 %v861
    %v895 = vpop.f32.mrf.mxu0
    %v896 = vadd.f32 %v422, %v895
    %897 = vmatmul.f32.gmra.mxu0 %v863
    %v898 = vpop.f32.mrf.mxu0
    %v899 = vadd.f32 %v423, %v898
    %900 = vmatmul.f32.gmra.mxu0 %v865
    %v901 = vpop.f32.mrf.mxu0
    %v902 = vadd.f32 %v424, %v901
    %903 = vdwg.mxu0
    %v904 = vsel %vm256, %v893, -inf
    %905 = vmax.xlane.f32.xlu0 %v904
    %v906 = vpop.xlane.xlu0 %905
    %v907 = vsel %vm256, %v896, -inf
    %908 = vmax.xlane.f32.xlu0 %v907
    %v909 = vpop.xlane.xlu0 %908
    %v910 = vsel %vm256, %v899, -inf
    %911 = vmax.xlane.f32.xlu0 %v910
    %v912 = vpop.xlane.xlu0 %911
    %v913 = vsel %vm256, %v902, -inf
    %914 = vmax.xlane.f32.xlu0 %v913
    %v915 = vpop.xlane.xlu0 %914
    %v916 = vsub.f32 %v893, %v906
    %v917 = vsub.f32 %v896, %v909
    %v918 = vsub.f32 %v899, %v912
    %v919 = vsub.f32 %v902, %v915
    %v920 = vmul.f32 %v916, 1.442695
    %v921 = vpow.pop %v920
    %v922 = vmul.f32 %v917, 1.442695
    %v923 = vpow.pop %v922
    %v924 = vmul.f32 %v918, 1.442695
    %v925 = vpow.pop %v924
    %v926 = vmul.f32 %v919, 1.442695
    %v927 = vpow.pop %v926
    %v928 = vsel %vm256, %v921, 0.0
    %929 = vadd.xlane.f32.xlu0 %v928
    %v930 = vpop.xlane.xlu0 %929
    %v931 = vsel %vm256, %v923, 0.0
    %932 = vadd.xlane.f32.xlu0 %v931
    %v933 = vpop.xlane.xlu0 %932
    %v934 = vsel %vm256, %v925, 0.0
    %935 = vadd.xlane.f32.xlu0 %v934
    %v936 = vpop.xlane.xlu0 %935
    %v937 = vsel %vm256, %v927, 0.0
    %938 = vadd.xlane.f32.xlu0 %v937
    %v939 = vpop.xlane.xlu0 %938
    %v940 = vrcp.pop %v930
    %v941 = vrcp.pop %v933
    %v942 = vrcp.pop %v936
    %v943 = vrcp.pop %v939
    %v944 = vmul.f32 %v930, %v940
    %v945 = vmul.f32 %v933, %v941
    %v946 = vmul.f32 %v936, %v942
    %v947 = vmul.f32 %v939, %v943
    %v948 = vsub.f32 2.0, %v944
    %v949 = vsub.f32 2.0, %v945
    %v950 = vsub.f32 2.0, %v946
    %v951 = vsub.f32 2.0, %v947
    %v952 = vmul.f32 %v940, %v948
    %v953 = vmul.f32 %v941, %v949
    %v954 = vmul.f32 %v942, %v950
    %v955 = vmul.f32 %v943, %v951
    %v956 = vmul.f32 %v921, %v952
    %v957 = vmul.f32 %v923, %v953
    %v958 = vmul.f32 %v925, %v954
    %v959 = vmul.f32 %v927, %v955
    %960 = vrot.lane.b32.xlu0 %v406, 48
    %v961 = vpop.permute.xlu0 %960
    %962 = vrot.lane.b32.xlu0 %v409, 48
    %v963 = vpop.permute.xlu0 %962
    %964 = vrot.lane.b32.xlu0 %v412, 48
    %v965 = vpop.permute.xlu0 %964
    %966 = vrot.lane.b32.xlu0 %v415, 48
    %v967 = vpop.permute.xlu0 %966
    %v973 = vsel %vm256, %v956, 0
    %v976 = vsel %vm256, %v957, 0
    %v979 = vsel %vm256, %v958, 0
    %v982 = vsel %vm256, %v959, 0
    %984 = vmatpush.msra.mxu0 0.0
    %985 = vmatpush.msra.mxu0 0.0
    %986 = vmatpush.msra.mxu0 0.0
    %987 = vmatpush.msra.mxu0 0.0
    %988 = vmatpush.msra.mxu0 0.0
    %989 = vmatpush.msra.mxu0 0.0
    %990 = vmatpush.msra.mxu0 0.0
    %991 = vmatpush.msra.mxu0 0.0
    %992 = vmatpush.msra.mxu0 0.0
    %993 = vmatpush.msra.mxu0 0.0
    %994 = vmatpush.msra.mxu0 0.0
    %995 = vmatpush.msra.mxu0 0.0
    %996 = vmatpush.msra.mxu0 %v967
    %997 = vmatpush.msra.mxu0 %v965
    %998 = vmatpush.msra.mxu0 %v963
    %999 = vmatpush.msra.mxu0 %v961
    %1000 = vmatmul.f32.gmra.mxu0 %v973
    %v1001 = vpop.f32.mrf.mxu0
    %v1002 = vadd.f32 0.0, %v1001
    %1003 = vmatmul.f32.gmra.mxu0 %v976
    %v1004 = vpop.f32.mrf.mxu0
    %v1005 = vadd.f32 0.0, %v1004
    %1006 = vmatmul.f32.gmra.mxu0 %v979
    %v1007 = vpop.f32.mrf.mxu0
    %v1008 = vadd.f32 0.0, %v1007
    %1009 = vmatmul.f32.gmra.mxu0 %v982
    %v1010 = vpop.f32.mrf.mxu0
    %v1011 = vadd.f32 0.0, %v1010
    %1012 = vdwg.mxu0
    %v1014 = vsel %vm226, %v1002, 0
    %v1017 = vsel %vm226, %v1005, 0
    %v1020 = vsel %vm226, %v1008, 0
    %v1023 = vsel %vm226, %v1011, 0
    %1025 = vmatpush.msra.mxu0 0.0
    %1026 = vmatpush.msra.mxu0 0.0
    %1027 = vmatpush.msra.mxu0 0.0
    %1028 = vmatpush.msra.mxu0 0.0
    %1029 = vmatpush.msra.mxu0 0.0
    %1030 = vmatpush.msra.mxu0 0.0
    %1031 = vmatpush.msra.mxu0 0.0
    %1032 = vmatpush.msra.mxu0 0.0
    %1033 = vmatpush.msra.mxu0 0.0
    %1034 = vmatpush.msra.mxu0 0.0
    %1035 = vmatpush.msra.mxu0 0.0
    %1036 = vmatpush.msra.mxu0 0.0
    %1037 = vmatpush.msra.mxu0 0.0
    %1038 = vmatpush.msra.mxu0 0.0
    %1039 = vmatpush.msra.mxu0 0.0
    %1040 = vmatpush.msra.mxu0 %v419
    %1041 = vmatmul.f32.gmra.mxu0 %v1014
    %v1042 = vpop.f32.mrf.mxu0
    %v1043 = vadd.f32 0.0, %v1042
    %1044 = vmatmul.f32.gmra.mxu0 %v1017
    %v1045 = vpop.f32.mrf.mxu0
    %v1046 = vadd.f32 0.0, %v1045
    %1047 = vmatmul.f32.gmra.mxu0 %v1020
    %v1048 = vpop.f32.mrf.mxu0
    %v1049 = vadd.f32 0.0, %v1048
    %1050 = vmatmul.f32.gmra.mxu0 %v1023
    %v1051 = vpop.f32.mrf.mxu0
    %v1052 = vadd.f32 0.0, %v1051
    %1053 = vdwg.mxu0
    %v1054 = vadd.f32 %v832, %v1043
    %v1055 = vadd.f32 %v835, %v1046
    %v1056 = vadd.f32 %v838, %v1049
    %v1057 = vadd.f32 %v841, %v1052
    %1058 = vrot.lane.b32.xlu0 %v406, 104
    %v1059 = vpop.permute.xlu0 %1058
    %1060 = vrot.lane.b32.xlu0 %v409, 104
    %v1061 = vpop.permute.xlu0 %1060
    %1062 = vrot.lane.b32.xlu0 %v412, 104
    %v1063 = vpop.permute.xlu0 %1062
    %1064 = vrot.lane.b32.xlu0 %v415, 104
    %v1065 = vpop.permute.xlu0 %1064
    %1066 = vrot.lane.b32.xlu0 %v406, 72
    %v1067 = vpop.permute.xlu0 %1066
    %1068 = vrot.lane.b32.xlu0 %v409, 72
    %v1069 = vpop.permute.xlu0 %1068
    %1070 = vrot.lane.b32.xlu0 %v412, 72
    %v1071 = vpop.permute.xlu0 %1070
    %1072 = vrot.lane.b32.xlu0 %v415, 72
    %v1073 = vpop.permute.xlu0 %1072
    %v1074 = vsel %vm226, %v1059, 0
    %v1076 = vsel %vm226, %v1061, 0
    %v1078 = vsel %vm226, %v1063, 0
    %v1080 = vsel %vm226, %v1065, 0
    %v1082 = vsel %vm226, %v1067, 0
    %v1084 = vsel %vm226, %v1069, 0
    %v1086 = vsel %vm226, %v1071, 0
    %v1088 = vsel %vm226, %v1073, 0
    %1090 = vmatpush.xpose.msra.mxu0 0.0
    %1091 = vmatpush.xpose.msra.mxu0 0.0
    %1092 = vmatpush.xpose.msra.mxu0 0.0
    %1093 = vmatpush.xpose.msra.mxu0 0.0
    %1094 = vmatpush.xpose.msra.mxu0 0.0
    %1095 = vmatpush.xpose.msra.mxu0 0.0
    %1096 = vmatpush.xpose.msra.mxu0 0.0
    %1097 = vmatpush.xpose.msra.mxu0 0.0
    %1098 = vmatpush.xpose.msra.mxu0 0.0
    %1099 = vmatpush.xpose.msra.mxu0 0.0
    %1100 = vmatpush.xpose.msra.mxu0 0.0
    %1101 = vmatpush.xpose.msra.mxu0 0.0
    %1102 = vmatpush.xpose.msra.mxu0 %v1088
    %1103 = vmatpush.xpose.msra.mxu0 %v1086
    %1104 = vmatpush.xpose.msra.mxu0 %v1084
    %1105 = vmatpush.xpose.msra.mxu0 %v1082
    %1106 = vmatmul.f32.gmra.mxu0 %v1074
    %v1107 = vpop.f32.mrf.mxu0
    %v1108 = vadd.f32 %v421, %v1107
    %1109 = vmatmul.f32.gmra.mxu0 %v1076
    %v1110 = vpop.f32.mrf.mxu0
    %v1111 = vadd.f32 %v422, %v1110
    %1112 = vmatmul.f32.gmra.mxu0 %v1078
    %v1113 = vpop.f32.mrf.mxu0
    %v1114 = vadd.f32 %v423, %v1113
    %1115 = vmatmul.f32.gmra.mxu0 %v1080
    %v1116 = vpop.f32.mrf.mxu0
    %v1117 = vadd.f32 %v424, %v1116
    %1118 = vdwg.mxu0
    %v1119 = vsel %vm256, %v1108, -inf
    %1120 = vmax.xlane.f32.xlu0 %v1119
    %v1121 = vpop.xlane.xlu0 %1120
    %v1122 = vsel %vm256, %v1111, -inf
    %1123 = vmax.xlane.f32.xlu0 %v1122
    %v1124 = vpop.xlane.xlu0 %1123
    %v1125 = vsel %vm256, %v1114, -inf
    %1126 = vmax.xlane.f32.xlu0 %v1125
    %v1127 = vpop.xlane.xlu0 %1126
    %v1128 = vsel %vm256, %v1117, -inf
    %1129 = vmax.xlane.f32.xlu0 %v1128
    %v1130 = vpop.xlane.xlu0 %1129
    %v1131 = vsub.f32 %v1108, %v1121
    %v1132 = vsub.f32 %v1111, %v1124
    %v1133 = vsub.f32 %v1114, %v1127
    %v1134 = vsub.f32 %v1117, %v1130
    %v1135 = vmul.f32 %v1131, 1.442695
    %v1136 = vpow.pop %v1135
    %v1137 = vmul.f32 %v1132, 1.442695
    %v1138 = vpow.pop %v1137
    %v1139 = vmul.f32 %v1133, 1.442695
    %v1140 = vpow.pop %v1139
    %v1141 = vmul.f32 %v1134, 1.442695
    %v1142 = vpow.pop %v1141
    %v1143 = vsel %vm256, %v1136, 0.0
    %1144 = vadd.xlane.f32.xlu0 %v1143
    %v1145 = vpop.xlane.xlu0 %1144
    %v1146 = vsel %vm256, %v1138, 0.0
    %1147 = vadd.xlane.f32.xlu0 %v1146
    %v1148 = vpop.xlane.xlu0 %1147
    %v1149 = vsel %vm256, %v1140, 0.0
    %1150 = vadd.xlane.f32.xlu0 %v1149
    %v1151 = vpop.xlane.xlu0 %1150
    %v1152 = vsel %vm256, %v1142, 0.0
    %1153 = vadd.xlane.f32.xlu0 %v1152
    %v1154 = vpop.xlane.xlu0 %1153
    %v1155 = vrcp.pop %v1145
    %v1156 = vrcp.pop %v1148
    %v1157 = vrcp.pop %v1151
    %v1158 = vrcp.pop %v1154
    %v1159 = vmul.f32 %v1145, %v1155
    %v1160 = vmul.f32 %v1148, %v1156
    %v1161 = vmul.f32 %v1151, %v1157
    %v1162 = vmul.f32 %v1154, %v1158
    %v1163 = vsub.f32 2.0, %v1159
    %v1164 = vsub.f32 2.0, %v1160
    %v1165 = vsub.f32 2.0, %v1161
    %v1166 = vsub.f32 2.0, %v1162
    %v1167 = vmul.f32 %v1155, %v1163
    %v1168 = vmul.f32 %v1156, %v1164
    %v1169 = vmul.f32 %v1157, %v1165
    %v1170 = vmul.f32 %v1158, %v1166
    %v1171 = vmul.f32 %v1136, %v1167
    %v1172 = vmul.f32 %v1138, %v1168
    %v1173 = vmul.f32 %v1140, %v1169
    %v1174 = vmul.f32 %v1142, %v1170
    %1175 = vrot.lane.b32.xlu0 %v406, 40
    %v1176 = vpop.permute.xlu0 %1175
    %1177 = vrot.lane.b32.xlu0 %v409, 40
    %v1178 = vpop.permute.xlu0 %1177
    %1179 = vrot.lane.b32.xlu0 %v412, 40
    %v1180 = vpop.permute.xlu0 %1179
    %1181 = vrot.lane.b32.xlu0 %v415, 40
    %v1182 = vpop.permute.xlu0 %1181
    %v1188 = vsel %vm256, %v1171, 0
    %v1191 = vsel %vm256, %v1172, 0
    %v1194 = vsel %vm256, %v1173, 0
    %v1197 = vsel %vm256, %v1174, 0
    %1199 = vmatpush.msra.mxu0 0.0
    %1200 = vmatpush.msra.mxu0 0.0
    %1201 = vmatpush.msra.mxu0 0.0
    %1202 = vmatpush.msra.mxu0 0.0
    %1203 = vmatpush.msra.mxu0 0.0
    %1204 = vmatpush.msra.mxu0 0.0
    %1205 = vmatpush.msra.mxu0 0.0
    %1206 = vmatpush.msra.mxu0 0.0
    %1207 = vmatpush.msra.mxu0 0.0
    %1208 = vmatpush.msra.mxu0 0.0
    %1209 = vmatpush.msra.mxu0 0.0
    %1210 = vmatpush.msra.mxu0 0.0
    %1211 = vmatpush.msra.mxu0 %v1182
    %1212 = vmatpush.msra.mxu0 %v1180
    %1213 = vmatpush.msra.mxu0 %v1178
    %1214 = vmatpush.msra.mxu0 %v1176
    %1215 = vmatmul.f32.gmra.mxu0 %v1188
    %v1216 = vpop.f32.mrf.mxu0
    %v1217 = vadd.f32 0.0, %v1216
    %1218 = vmatmul.f32.gmra.mxu0 %v1191
    %v1219 = vpop.f32.mrf.mxu0
    %v1220 = vadd.f32 0.0, %v1219
    %1221 = vmatmul.f32.gmra.mxu0 %v1194
    %v1222 = vpop.f32.mrf.mxu0
    %v1223 = vadd.f32 0.0, %v1222
    %1224 = vmatmul.f32.gmra.mxu0 %v1197
    %v1225 = vpop.f32.mrf.mxu0
    %v1226 = vadd.f32 0.0, %v1225
    %1227 = vdwg.mxu0
    %v1229 = vsel %vm226, %v1217, 0
    %v1232 = vsel %vm226, %v1220, 0
    %v1235 = vsel %vm226, %v1223, 0
    %v1238 = vsel %vm226, %v1226, 0
    %1240 = vmatpush.msra.mxu0 0.0
    %1241 = vmatpush.msra.mxu0 0.0
    %1242 = vmatpush.msra.mxu0 0.0
    %1243 = vmatpush.msra.mxu0 0.0
    %1244 = vmatpush.msra.mxu0 0.0
    %1245 = vmatpush.msra.mxu0 0.0
    %1246 = vmatpush.msra.mxu0 0.0
    %1247 = vmatpush.msra.mxu0 0.0
    %1248 = vmatpush.msra.mxu0 0.0
    %1249 = vmatpush.msra.mxu0 0.0
    %1250 = vmatpush.msra.mxu0 0.0
    %1251 = vmatpush.msra.mxu0 0.0
    %1252 = vmatpush.msra.mxu0 0.0
    %1253 = vmatpush.msra.mxu0 0.0
    %1254 = vmatpush.msra.mxu0 0.0
    %1255 = vmatpush.msra.mxu0 %v420
    %1256 = vmatmul.f32.gmra.mxu0 %v1229
    %v1257 = vpop.f32.mrf.mxu0
    %v1258 = vadd.f32 0.0, %v1257
    %1259 = vmatmul.f32.gmra.mxu0 %v1232
    %v1260 = vpop.f32.mrf.mxu0
    %v1261 = vadd.f32 0.0, %v1260
    %1262 = vmatmul.f32.gmra.mxu0 %v1235
    %v1263 = vpop.f32.mrf.mxu0
    %v1264 = vadd.f32 0.0, %v1263
    %1265 = vmatmul.f32.gmra.mxu0 %v1238
    %v1266 = vpop.f32.mrf.mxu0
    %v1267 = vadd.f32 0.0, %v1266
    %1268 = vdwg.mxu0
    %v1269 = vadd.f32 %v1054, %v1258
    %v1270 = vadd.f32 %v1055, %v1261
    %v1271 = vadd.f32 %v1056, %v1264
    %v1272 = vadd.f32 %v1057, %v1267
    %v1273 = vld [vmem:[%s11] sm:$0x1]
    %v1275 = vperm.slane %v1273, 0
    %v1277 = vadd.f32 %v1269, %v1275
    %v1278 = vadd.f32 %v1270, %v1275
    %v1279 = vadd.f32 %v1271, %v1275
    %v1280 = vadd.f32 %v1272, %v1275
    %v1281 = vld [vmem:[%s12] sm:$0x1]
    %v1283 = vperm.slane %v1281, 0
    %v1285 = vmul.f32 %v1283, %v1277
    %v1286 = vmul.f32 %v1283, %v1278
    %v1287 = vmul.f32 %v1283, %v1279
    %v1288 = vmul.f32 %v1283, %v1280
    %v1289 = vadd.f32 %v364, %v1285
    %v1290 = vadd.f32 %v365, %v1286
    %v1291 = vadd.f32 %v366, %v1287
    %v1292 = vadd.f32 %v367, %v1288
    %1293 = vst.msk [vmem:[#allocation17] sm:$0xff] %vm256, %v1289
    %1294 = vst.msk [vmem:[#allocation17 + $0x8] sm:$0xff] %vm256, %v1290
    %1295 = vst.msk [vmem:[#allocation18] sm:$0xff] %vm256, %v1291
    %1296 = vst.msk [vmem:[#allocation18 + $0x8] sm:$0xff] %vm256, %v1292
    // Predicated region
    $region94: #{tpu_custom_call.1} parent=1 // pred_check
      _
    $region95: #{tpu_custom_call.1} parent=1 // pred_check_branch
      %1298 = sbr.rel (0) target = $region97
    $region96: #{tpu_custom_call.1} parent=1 // pred_region
      %1300 = vsyncadd [#allocation4], 0
      %s1301 = sshll.u32 [#allocation17], 4
      %s1302 = int_to_ptr.vmem [resolvable:$true] %s1301
      %s1303 = sshll.u32 %s14, 4
      %s1304 = int_to_ptr.hbm [resolvable:$true] %s1303
      %1309 = dma.vmem_to_hbm [thread:$0]  %s1302, 256, %s1304, [#allocation4], 128, 128, 8
    $region97: #{tpu_custom_call.1} parent=1 // pred_fallthru
      _
    // Predicated region
    $region98: #{tpu_custom_call.1} parent=1 // pred_check
      _
    $region99: #{tpu_custom_call.1} parent=1 // pred_check_branch
      %1311 = sbr.rel (0) target = $region101
    $region100: #{tpu_custom_call.1} parent=1 // pred_region
      %1313 = vsyncadd [#allocation19], 0
      %s1314 = sshll.u32 [#allocation18], 4
      %s1315 = int_to_ptr.vmem [resolvable:$true] %s1314
      %s1316 = sshll.u32 %s15, 4
      %s1317 = int_to_ptr.hbm [resolvable:$true] %s1316
      %1322 = dma.vmem_to_hbm [thread:$0]  %s1315, 256, %s1317, [#allocation19], 128, 128, 8
    $region101: #{tpu_custom_call.1} parent=1 // pred_fallthru
      _
    // Predicated region
    $region102: #{tpu_custom_call.1} parent=1 // pred_check
      _
    $region103: #{tpu_custom_call.1} parent=1 // pred_check_branch
      %1324 = sbr.rel (0) target = $region105
    $region104: #{tpu_custom_call.1} parent=1 // pred_region
      %1326 = dma.done [#allocation4], 256
    $region105: #{tpu_custom_call.1} parent=1 // pred_fallthru
      _
    // Predicated region
    $region106: #{tpu_custom_call.1} parent=1 // pred_check
      _
    $region107: #{tpu_custom_call.1} parent=1 // pred_check_branch
      %1328 = sbr.rel (0) target = $region109
    $region108: #{tpu_custom_call.1} parent=1 // pred_region
      %1330 = dma.done [#allocation19], 256
    $region109: #{tpu_custom_call.1} parent=1 // pred_fallthru
      _
    %1331 = vsyncpa [#allocation3], 1
    %1332 = vsyncpa [#allocation6], 1
    %1333 = vsyncpa [#allocation9], 1
    %1334 = vsyncpa [#allocation12], 1
    %1335 = vsyncpa [#allocation15], 1
    %1336 = vsyncpa [#allocation4], 1
    %1337 = vsyncpa [#allocation19], 1

</llo_original>
